<compile_context>
chip_gen: v7x
topology: tpu7x:2x2x1
jax: 0.10.0
libtpu: 0.0.40
codegen_flags: <defaults>
</compile_context>

<pallas_src>
import jax
import jax.numpy as jnp
from jax.experimental import pallas as pl
from jax.experimental.pallas import tpu as pltpu


def _round_up(x, m):
    return ((x + m - 1) // m) * m


def _pooled_head_kernel(ids_ref, lens_ref, mask_ref, w_ref, b_ref, table_ref,
                        out_ref, emb_buf, acc_vec, acc_den, sem):
    """One grid step = (one batch row, one s_tile slice of its tokens).

    ids_ref  : SMEM (B*S_pad,) int32     flattened token ids (scalar prefetch)
    lens_ref : SMEM (B,) int32           1 + last valid position per row
    mask_ref : VMEM (S_pad, 1) f32       full attention-mask row (fetched once/row)
    w_ref    : VMEM (1, H) f32           classifier weight row
    b_ref    : SMEM (1, 1) f32           classifier bias
    table_ref: HBM  (V, H)               embedding table (encoder stand-in)
    out_ref  : VMEM (1, 1) f32           logit for this batch row
    emb_buf  : VMEM (2, s_tile, H)       double-buffered gathered rows
    acc_vec  : VMEM (1, H) f32           running sum(emb * mask)
    acc_den  : VMEM (1, 1) f32           running sum(mask)
    sem      : DMA semaphores (2,)       one per double-buffer slot
    """
    b = pl.program_id(0)
    s = pl.program_id(1)
    n_s = pl.num_programs(1)
    s_tile = emb_buf.shape[1]
    s_pad = n_s * s_tile
    vocab = table_ref.shape[0]

    slot = s % 2
    row_len = lens_ref[b]

    def issue_tile(slot_idx, tile_idx):
        # One contiguous H-wide row DMA per token, HBM -> VMEM, all copies of
        # a tile share the slot's semaphore.  (Static unroll: trip count is
        # the compile-time s_tile.)
        base = b * s_pad + tile_idx * s_tile
        for t in range(s_tile):
            # Clamp defensively: padded-position ids must stay < vocab.
            row = jnp.clip(ids_ref[base + t], 0, vocab - 1)
            pltpu.make_async_copy(table_ref.at[pl.ds(row, 1)],
                                  emb_buf.at[slot_idx, pl.ds(t, 1)],
                                  sem.at[slot_idx]).start()

    cur_valid = s * s_tile < row_len

    # First tile of a row has nothing prefetched yet: issue it here.
    @pl.when(jnp.logical_and(s == 0, cur_valid))
    def _():
        issue_tile(slot, s)

    # Prefetch the NEXT tile of this row into the other slot BEFORE any
    # dma_wait: keeps SMEM id reads ahead of waits (sst->sld forwarding) and
    # overlaps the next gather's HBM latency with this step's wait + compute.
    next_valid = jnp.logical_and(s + 1 < n_s, (s + 1) * s_tile < row_len)

    @pl.when(next_valid)
    def _():
        issue_tile(1 - slot, s + 1)

    @pl.when(s == 0)
    def _():
        acc_vec[...] = jnp.zeros_like(acc_vec)
        acc_den[...] = jnp.zeros_like(acc_den)

    # Wait + accumulate for the current tile (skipped for fully-padded tiles).
    @pl.when(cur_valid)
    def _():
        # Per-copy waits on the shared per-slot semaphore (each wait
        # decrements exactly what its row copy signalled).
        for t in range(s_tile):
            pltpu.make_async_copy(table_ref.at[pl.ds(0, 1)],
                                  emb_buf.at[slot, pl.ds(t, 1)],
                                  sem.at[slot]).wait()

        emb = emb_buf[slot].astype(jnp.float32)            # (s_tile, H)
        s_base = pl.multiple_of(s * s_tile, s_tile)
        msk = mask_ref[pl.ds(s_base, s_tile), :]           # (s_tile, 1), S on sublanes
        # Deferred classifier weight: hot loop is VPU multiply + sublane reduce.
        acc_vec[...] += jnp.sum(emb * msk, axis=0, keepdims=True)   # (1, H)
        acc_den[...] += jnp.sum(msk, axis=0, keepdims=True)         # (1, 1)

    # Finalize once per row: fold in the head weight, masked mean, bias.
    @pl.when(s == n_s - 1)
    def _():
        num = jnp.sum(acc_vec[...] * w_ref[...], axis=1, keepdims=True)  # (1, 1)
        den = jnp.maximum(acc_den[...], 1.0)
        out_ref[...] = num / den + b_ref[0, 0]


def classify(input_ids, attention_mask, embed_table, fc1_w, fc1_b, *,
             s_tile=256):
    """Fused embedding-gather + masked mean pooling + Linear(H -> 1)."""
    B, S = input_ids.shape
    V, H = embed_table.shape

    if embed_table.dtype not in (jnp.float32, jnp.bfloat16):
        embed_table = embed_table.astype(jnp.float32)

    # Effective sequence tile: multiple of 8 (sublane alignment), <= padded S.
    s_tile = int(min(int(s_tile), _round_up(S, 8)))
    s_tile = _round_up(max(s_tile, 8), 8)
    S_pad = _round_up(S, s_tile)
    n_s = S_pad // s_tile

    ids = input_ids.astype(jnp.int32)
    mask = attention_mask.astype(jnp.float32)
    if S_pad != S:
        ids = jnp.pad(ids, ((0, 0), (0, S_pad - S)))
        mask = jnp.pad(mask, ((0, 0), (0, S_pad - S)))

    # Flatten ids to 1-D for SMEM prefetch (avoids 2-D SMEM pad blow-up).
    ids_flat = ids.reshape(-1)
    # Row "length" = 1 + last position whose mask is nonzero (0 if all masked):
    # tiles entirely past this bound are skipped (DMA + compute) in-kernel.
    pos = jnp.arange(S_pad, dtype=jnp.int32)[None, :]
    lens = jnp.max(jnp.where(mask > 0, pos + 1, 0), axis=1).astype(jnp.int32)

    mask3 = mask.reshape(B, S_pad, 1)                 # S on sublanes
    w_row = fc1_w.reshape(1, H).astype(jnp.float32)
    bias = fc1_b.reshape(1, 1).astype(jnp.float32)

    itemsize = jnp.dtype(embed_table.dtype).itemsize

    grid_spec = pltpu.PrefetchScalarGridSpec(
        num_scalar_prefetch=2,                        # token ids + row lengths -> SMEM
        grid=(B, n_s),
        in_specs=[
            # mask: fetched once per batch row (index map independent of s).
            pl.BlockSpec((None, S_pad, 1), lambda b, s, ids, lens: (b, 0, 0)),
            pl.BlockSpec((1, H), lambda b, s, ids, lens: (0, 0)),       # weight
            pl.BlockSpec(memory_space=pltpu.MemorySpace.SMEM),          # bias
            pl.BlockSpec(memory_space=pl.ANY),                          # table (HBM)
        ],
        out_specs=pl.BlockSpec((None, 1, 1), lambda b, s, ids, lens: (b, 0, 0)),
        scratch_shapes=[
            pltpu.VMEM((2, s_tile, H), embed_table.dtype),  # double-buffered gather
            pltpu.VMEM((1, H), jnp.float32),                # sum(emb*mask) accumulator
            pltpu.VMEM((1, 1), jnp.float32),                # sum(mask) accumulator
            pltpu.SemaphoreType.DMA((2,)),                  # one sem per buffer slot
        ],
    )

    # VMEM budget (fits v7x's 64 MiB physical / 32 MiB default-scoped VMEM for
    # any reasonable s_tile; larger tiles are fine on v5e/v6e's 128 MiB).
    vmem_need = (2 * s_tile * H * itemsize          # gather double buffer
                 + 2 * S_pad * 4                    # mask (BlockSpec double-buffered)
                 + 2 * H * 4 + H * 4 + 8192)        # weight, acc_vec, misc
    vmem_limit = int(min(max(2 * vmem_need, 16 * 2**20), 64 * 2**20))

    cost = pl.CostEstimate(
        flops=2 * B * S_pad * H + 2 * B * H,
        transcendentals=0,
        bytes_accessed=B * S_pad * (H * itemsize + 8) + H * 4 + B * 4,
    )

    out3 = pl.pallas_call(
        _pooled_head_kernel,
        out_shape=jax.ShapeDtypeStruct((B, 1, 1), jnp.float32),
        grid_spec=grid_spec,
        compiler_params=pltpu.CompilerParams(
            dimension_semantics=("parallel", "arbitrary"),
            vmem_limit_bytes=vmem_limit),
        cost_estimate=cost,
    )(ids_flat, lens, mask3, w_row, bias, embed_table)
    return out3.reshape(B, 1)


def model_forward(input_ids, attention_mask, params, *, s_tile=256):
    """Stand-in forward: fused (gather -> masked mean pool -> Linear(1))."""
    return classify(
        input_ids,
        attention_mask,
        params["embed_table"],
        params["fc1_w"],
        params["fc1_b"],
        s_tile=s_tile,
    )


if __name__ == "__main__":
    key = jax.random.PRNGKey(0)
    k_emb, k_ids, k_w, k_b = jax.random.split(key, 4)

    # Small shapes consistent with the module's forward:
    # batch=2 sequences, seq_len=30 tokens (padded to 32 = 4 tiles of 8),
    # hidden=128 (stand-in for text_embedding=1024), vocab=64.
    B, S, H = 2, 30, 128
    VOCAB = 64

    params = {
        "embed_table": jax.random.normal(k_emb, (VOCAB, H), dtype=jnp.float32) * 0.02,
        "fc1_w": jax.random.normal(k_w, (H, 1), dtype=jnp.float32) * 0.1,
        "fc1_b": jax.random.normal(k_b, (1,), dtype=jnp.float32) * 0.01,
    }

    input_ids = jax.random.randint(
        k_ids, (B, S), minval=0, maxval=VOCAB, dtype=jnp.int32)
    # row 0 fully valid; row 1 right-padded after 11 tokens (mimics padding=True)
    attention_mask = jnp.stack([
        jnp.ones((S,), dtype=jnp.int32),
        (jnp.arange(S) < 11).astype(jnp.int32),
    ], axis=0)

    # Small explicit tile so the demo exercises multi-tile accumulation, the
    # double-buffered prefetch path and the padded-tile skip (production
    # shapes use the larger default s_tile=256).
    out = model_forward(input_ids, attention_mask, params, s_tile=8)
    out = jax.block_until_ready(out)

    # pure-JAX reference check
    emb = params["embed_table"][input_ids]
    m = attention_mask.astype(jnp.float32)
    pooled = (emb * m[:, :, None]).sum(1) / jnp.maximum(m.sum(1, keepdims=True), 1.0)
    ref = pooled @ params["fc1_w"] + params["fc1_b"]
    assert out.shape == (B, 1)
    assert jnp.allclose(out, ref, atol=1e-5, rtol=1e-5), (out, ref)

    print("KERNEL_OK")
</pallas_src>

<mosaic_0001>
module attributes {stable_mosaic.version = 11 : i64} {
  func.func @_pooled_head_kernel(%arg0: i32, %arg1: i32, %arg2: memref<64xi32, #tpu.memory_space<smem>>, %arg3: memref<2xi32, #tpu.memory_space<smem>>, %arg4: memref<1x32x1xf32, #tpu.memory_space<vmem>>, %arg5: memref<1x128xf32, #tpu.memory_space<vmem>>, %arg6: memref<1x1xf32, #tpu.memory_space<smem>>, %arg7: memref<64x128xf32, #tpu.memory_space<any>>, %arg8: memref<1x1x1xf32, #tpu.memory_space<vmem>>, %arg9: memref<2x8x128xf32, #tpu.memory_space<vmem>>, %arg10: memref<1x128xf32, #tpu.memory_space<vmem>>, %arg11: memref<1x1xf32, #tpu.memory_space<vmem>>, %arg12: memref<2x!tpu.dma_semaphore, #tpu.memory_space<semaphore_mem>>) attributes {dimension_semantics = [#tpu.dimension_semantics<parallel>, #tpu.dimension_semantics<arbitrary>], iteration_bounds = array<i64: 2, 4>, scalar_prefetch = 2 : i64, scratch_operands = 4 : i64, tpu.core_type = #tpu.core_type<tc>, window_params = [{transform_indices = @transform_0, window_bounds = array<i64: 1, 32, 1>}, {pipeline_mode = #tpu.pipeline_mode<synchronous>, transform_indices = @transform_1, window_bounds = array<i64: 1, 128>}, {transform_indices = @transform_2, window_bounds = array<i64: 1, 1>}, {}, {transform_indices = @transform_4, window_bounds = array<i64: 1, 1, 1>}]} {
    %c2_i32 = arith.constant 2 : i32
    %c0_i32 = arith.constant 0 : i32
    %0 = arith.cmpi eq, %c2_i32, %c0_i32 : i32
    %c1_i32 = arith.constant 1 : i32
    %1 = arith.select %0, %c1_i32, %c2_i32 : i32
    %2 = arith.remsi %arg1, %1 : i32
    %c0_i32_0 = arith.constant 0 : i32
    %3 = arith.cmpi ne, %2, %c0_i32_0 : i32
    %c0_i32_1 = arith.constant 0 : i32
    %4 = arith.cmpi slt, %2, %c0_i32_1 : i32
    %c0_i32_2 = arith.constant 0 : i32
    %5 = arith.cmpi slt, %1, %c0_i32_2 : i32
    %6 = arith.xori %4, %5 : i1
    %7 = arith.andi %6, %3 : i1
    %8 = arith.addi %2, %1 : i32
    %9 = arith.select %7, %8, %2 : i32
    %10 = arith.index_cast %arg0 : i32 to index
    %11 = memref.load %arg3[%10] : memref<2xi32, #tpu.memory_space<smem>>
    %c8_i32 = arith.constant 8 : i32
    %12 = arith.muli %arg1, %c8_i32 : i32
    %13 = arith.cmpi slt, %12, %11 : i32
    %c0_i32_3 = arith.constant 0 : i32
    %14 = arith.cmpi eq, %arg1, %c0_i32_3 : i32
    %15 = arith.andi %14, %13 : i1
    %16 = arith.extui %15 : i1 to i32
    %c0_i32_4 = arith.constant 0 : i32
    %17 = arith.cmpi ne, %16, %c0_i32_4 : i32
    scf.if %17 {
      %c32_i32 = arith.constant 32 : i32
      %34 = arith.muli %arg0, %c32_i32 : i32
      %c8_i32_13 = arith.constant 8 : i32
      %35 = arith.muli %arg1, %c8_i32_13 : i32
      %36 = arith.addi %34, %35 : i32
      %c0_i32_14 = arith.constant 0 : i32
      %37 = arith.addi %36, %c0_i32_14 : i32
      %38 = arith.index_cast %37 : i32 to index
      %39 = memref.load %arg2[%38] : memref<64xi32, #tpu.memory_space<smem>>
      %c0_i32_15 = arith.constant 0 : i32
      %c63_i32 = arith.constant 63 : i32
      %40 = arith.maxsi %c0_i32_15, %39 : i32
      %41 = arith.minsi %c63_i32, %40 : i32
      %c0_i32_16 = arith.constant 0 : i32
      %42 = tpu.memref_slice %arg7[%41, %c0_i32_16] : memref<64x128xf32, #tpu.memory_space<any>> -> memref<1x128xf32, #tpu.memory_space<any>>
      %c0_i32_17 = arith.constant 0 : i32
      %c0_i32_18 = arith.constant 0 : i32
      %43 = tpu.memref_slice %arg9[%9, %c0_i32_17, %c0_i32_18] : memref<2x8x128xf32, #tpu.memory_space<vmem>> -> memref<1x1x128xf32, #tpu.memory_space<vmem>>
      %44 = tpu.memref_squeeze %43 : memref<1x1x128xf32, #tpu.memory_space<vmem>> -> memref<1x128xf32, #tpu.memory_space<vmem>>
      %45 = tpu.memref_slice %arg12[%9] : memref<2x!tpu.dma_semaphore, #tpu.memory_space<semaphore_mem>> -> memref<1x!tpu.dma_semaphore, #tpu.memory_space<semaphore_mem>>
      %46 = tpu.memref_squeeze %45 : memref<1x!tpu.dma_semaphore, #tpu.memory_space<semaphore_mem>> -> memref<!tpu.dma_semaphore, #tpu.memory_space<semaphore_mem>>
      tpu.enqueue_dma source(%42 : memref<1x128xf32, #tpu.memory_space<any>>) target(%44 : memref<1x128xf32, #tpu.memory_space<vmem>>) target_semaphore(%46 : memref<!tpu.dma_semaphore, #tpu.memory_space<semaphore_mem>>)
      %c1_i32_19 = arith.constant 1 : i32
      %47 = arith.addi %36, %c1_i32_19 : i32
      %48 = arith.index_cast %47 : i32 to index
      %49 = memref.load %arg2[%48] : memref<64xi32, #tpu.memory_space<smem>>
      %c0_i32_20 = arith.constant 0 : i32
      %c63_i32_21 = arith.constant 63 : i32
      %50 = arith.maxsi %c0_i32_20, %49 : i32
      %51 = arith.minsi %c63_i32_21, %50 : i32
      %c0_i32_22 = arith.constant 0 : i32
      %52 = tpu.memref_slice %arg7[%51, %c0_i32_22] : memref<64x128xf32, #tpu.memory_space<any>> -> memref<1x128xf32, #tpu.memory_space<any>>
      %c1_i32_23 = arith.constant 1 : i32
      %c0_i32_24 = arith.constant 0 : i32
      %53 = tpu.memref_slice %arg9[%9, %c1_i32_23, %c0_i32_24] : memref<2x8x128xf32, #tpu.memory_space<vmem>> -> memref<1x1x128xf32, #tpu.memory_space<vmem>>
      %54 = tpu.memref_squeeze %53 : memref<1x1x128xf32, #tpu.memory_space<vmem>> -> memref<1x128xf32, #tpu.memory_space<vmem>>
      %55 = tpu.memref_slice %arg12[%9] : memref<2x!tpu.dma_semaphore, #tpu.memory_space<semaphore_mem>> -> memref<1x!tpu.dma_semaphore, #tpu.memory_space<semaphore_mem>>
      %56 = tpu.memref_squeeze %55 : memref<1x!tpu.dma_semaphore, #tpu.memory_space<semaphore_mem>> -> memref<!tpu.dma_semaphore, #tpu.memory_space<semaphore_mem>>
      tpu.enqueue_dma source(%52 : memref<1x128xf32, #tpu.memory_space<any>>) target(%54 : memref<1x128xf32, #tpu.memory_space<vmem>>) target_semaphore(%56 : memref<!tpu.dma_semaphore, #tpu.memory_space<semaphore_mem>>)
      %c2_i32_25 = arith.constant 2 : i32
      %57 = arith.addi %36, %c2_i32_25 : i32
      %58 = arith.index_cast %57 : i32 to index
      %59 = memref.load %arg2[%58] : memref<64xi32, #tpu.memory_space<smem>>
      %c0_i32_26 = arith.constant 0 : i32
      %c63_i32_27 = arith.constant 63 : i32
      %60 = arith.maxsi %c0_i32_26, %59 : i32
      %61 = arith.minsi %c63_i32_27, %60 : i32
      %c0_i32_28 = arith.constant 0 : i32
      %62 = tpu.memref_slice %arg7[%61, %c0_i32_28] : memref<64x128xf32, #tpu.memory_space<any>> -> memref<1x128xf32, #tpu.memory_space<any>>
      %c2_i32_29 = arith.constant 2 : i32
      %c0_i32_30 = arith.constant 0 : i32
      %63 = tpu.memref_slice %arg9[%9, %c2_i32_29, %c0_i32_30] : memref<2x8x128xf32, #tpu.memory_space<vmem>> -> memref<1x1x128xf32, #tpu.memory_space<vmem>>
      %64 = tpu.memref_squeeze %63 : memref<1x1x128xf32, #tpu.memory_space<vmem>> -> memref<1x128xf32, #tpu.memory_space<vmem>>
      %65 = tpu.memref_slice %arg12[%9] : memref<2x!tpu.dma_semaphore, #tpu.memory_space<semaphore_mem>> -> memref<1x!tpu.dma_semaphore, #tpu.memory_space<semaphore_mem>>
      %66 = tpu.memref_squeeze %65 : memref<1x!tpu.dma_semaphore, #tpu.memory_space<semaphore_mem>> -> memref<!tpu.dma_semaphore, #tpu.memory_space<semaphore_mem>>
      tpu.enqueue_dma source(%62 : memref<1x128xf32, #tpu.memory_space<any>>) target(%64 : memref<1x128xf32, #tpu.memory_space<vmem>>) target_semaphore(%66 : memref<!tpu.dma_semaphore, #tpu.memory_space<semaphore_mem>>)
      %c3_i32_31 = arith.constant 3 : i32
      %67 = arith.addi %36, %c3_i32_31 : i32
      %68 = arith.index_cast %67 : i32 to index
      %69 = memref.load %arg2[%68] : memref<64xi32, #tpu.memory_space<smem>>
      %c0_i32_32 = arith.constant 0 : i32
      %c63_i32_33 = arith.constant 63 : i32
      %70 = arith.maxsi %c0_i32_32, %69 : i32
      %71 = arith.minsi %c63_i32_33, %70 : i32
      %c0_i32_34 = arith.constant 0 : i32
      %72 = tpu.memref_slice %arg7[%71, %c0_i32_34] : memref<64x128xf32, #tpu.memory_space<any>> -> memref<1x128xf32, #tpu.memory_space<any>>
      %c3_i32_35 = arith.constant 3 : i32
      %c0_i32_36 = arith.constant 0 : i32
      %73 = tpu.memref_slice %arg9[%9, %c3_i32_35, %c0_i32_36] : memref<2x8x128xf32, #tpu.memory_space<vmem>> -> memref<1x1x128xf32, #tpu.memory_space<vmem>>
      %74 = tpu.memref_squeeze %73 : memref<1x1x128xf32, #tpu.memory_space<vmem>> -> memref<1x128xf32, #tpu.memory_space<vmem>>
      %75 = tpu.memref_slice %arg12[%9] : memref<2x!tpu.dma_semaphore, #tpu.memory_space<semaphore_mem>> -> memref<1x!tpu.dma_semaphore, #tpu.memory_space<semaphore_mem>>
      %76 = tpu.memref_squeeze %75 : memref<1x!tpu.dma_semaphore, #tpu.memory_space<semaphore_mem>> -> memref<!tpu.dma_semaphore, #tpu.memory_space<semaphore_mem>>
      tpu.enqueue_dma source(%72 : memref<1x128xf32, #tpu.memory_space<any>>) target(%74 : memref<1x128xf32, #tpu.memory_space<vmem>>) target_semaphore(%76 : memref<!tpu.dma_semaphore, #tpu.memory_space<semaphore_mem>>)
      %c4_i32_37 = arith.constant 4 : i32
      %77 = arith.addi %36, %c4_i32_37 : i32
      %78 = arith.index_cast %77 : i32 to index
      %79 = memref.load %arg2[%78] : memref<64xi32, #tpu.memory_space<smem>>
      %c0_i32_38 = arith.constant 0 : i32
      %c63_i32_39 = arith.constant 63 : i32
      %80 = arith.maxsi %c0_i32_38, %79 : i32
      %81 = arith.minsi %c63_i32_39, %80 : i32
      %c0_i32_40 = arith.constant 0 : i32
      %82 = tpu.memref_slice %arg7[%81, %c0_i32_40] : memref<64x128xf32, #tpu.memory_space<any>> -> memref<1x128xf32, #tpu.memory_space<any>>
      %c4_i32_41 = arith.constant 4 : i32
      %c0_i32_42 = arith.constant 0 : i32
      %83 = tpu.memref_slice %arg9[%9, %c4_i32_41, %c0_i32_42] : memref<2x8x128xf32, #tpu.memory_space<vmem>> -> memref<1x1x128xf32, #tpu.memory_space<vmem>>
      %84 = tpu.memref_squeeze %83 : memref<1x1x128xf32, #tpu.memory_space<vmem>> -> memref<1x128xf32, #tpu.memory_space<vmem>>
      %85 = tpu.memref_slice %arg12[%9] : memref<2x!tpu.dma_semaphore, #tpu.memory_space<semaphore_mem>> -> memref<1x!tpu.dma_semaphore, #tpu.memory_space<semaphore_mem>>
      %86 = tpu.memref_squeeze %85 : memref<1x!tpu.dma_semaphore, #tpu.memory_space<semaphore_mem>> -> memref<!tpu.dma_semaphore, #tpu.memory_space<semaphore_mem>>
      tpu.enqueue_dma source(%82 : memref<1x128xf32, #tpu.memory_space<any>>) target(%84 : memref<1x128xf32, #tpu.memory_space<vmem>>) target_semaphore(%86 : memref<!tpu.dma_semaphore, #tpu.memory_space<semaphore_mem>>)
      %c5_i32 = arith.constant 5 : i32
      %87 = arith.addi %36, %c5_i32 : i32
      %88 = arith.index_cast %87 : i32 to index
      %89 = memref.load %arg2[%88] : memref<64xi32, #tpu.memory_space<smem>>
      %c0_i32_43 = arith.constant 0 : i32
      %c63_i32_44 = arith.constant 63 : i32
      %90 = arith.maxsi %c0_i32_43, %89 : i32
      %91 = arith.minsi %c63_i32_44, %90 : i32
      %c0_i32_45 = arith.constant 0 : i32
      %92 = tpu.memref_slice %arg7[%91, %c0_i32_45] : memref<64x128xf32, #tpu.memory_space<any>> -> memref<1x128xf32, #tpu.memory_space<any>>
      %c5_i32_46 = arith.constant 5 : i32
      %c0_i32_47 = arith.constant 0 : i32
      %93 = tpu.memref_slice %arg9[%9, %c5_i32_46, %c0_i32_47] : memref<2x8x128xf32, #tpu.memory_space<vmem>> -> memref<1x1x128xf32, #tpu.memory_space<vmem>>
      %94 = tpu.memref_squeeze %93 : memref<1x1x128xf32, #tpu.memory_space<vmem>> -> memref<1x128xf32, #tpu.memory_space<vmem>>
      %95 = tpu.memref_slice %arg12[%9] : memref<2x!tpu.dma_semaphore, #tpu.memory_space<semaphore_mem>> -> memref<1x!tpu.dma_semaphore, #tpu.memory_space<semaphore_mem>>
      %96 = tpu.memref_squeeze %95 : memref<1x!tpu.dma_semaphore, #tpu.memory_space<semaphore_mem>> -> memref<!tpu.dma_semaphore, #tpu.memory_space<semaphore_mem>>
      tpu.enqueue_dma source(%92 : memref<1x128xf32, #tpu.memory_space<any>>) target(%94 : memref<1x128xf32, #tpu.memory_space<vmem>>) target_semaphore(%96 : memref<!tpu.dma_semaphore, #tpu.memory_space<semaphore_mem>>)
      %c6_i32 = arith.constant 6 : i32
      %97 = arith.addi %36, %c6_i32 : i32
      %98 = arith.index_cast %97 : i32 to index
      %99 = memref.load %arg2[%98] : memref<64xi32, #tpu.memory_space<smem>>
      %c0_i32_48 = arith.constant 0 : i32
      %c63_i32_49 = arith.constant 63 : i32
      %100 = arith.maxsi %c0_i32_48, %99 : i32
      %101 = arith.minsi %c63_i32_49, %100 : i32
      %c0_i32_50 = arith.constant 0 : i32
      %102 = tpu.memref_slice %arg7[%101, %c0_i32_50] : memref<64x128xf32, #tpu.memory_space<any>> -> memref<1x128xf32, #tpu.memory_space<any>>
      %c6_i32_51 = arith.constant 6 : i32
      %c0_i32_52 = arith.constant 0 : i32
      %103 = tpu.memref_slice %arg9[%9, %c6_i32_51, %c0_i32_52] : memref<2x8x128xf32, #tpu.memory_space<vmem>> -> memref<1x1x128xf32, #tpu.memory_space<vmem>>
      %104 = tpu.memref_squeeze %103 : memref<1x1x128xf32, #tpu.memory_space<vmem>> -> memref<1x128xf32, #tpu.memory_space<vmem>>
      %105 = tpu.memref_slice %arg12[%9] : memref<2x!tpu.dma_semaphore, #tpu.memory_space<semaphore_mem>> -> memref<1x!tpu.dma_semaphore, #tpu.memory_space<semaphore_mem>>
      %106 = tpu.memref_squeeze %105 : memref<1x!tpu.dma_semaphore, #tpu.memory_space<semaphore_mem>> -> memref<!tpu.dma_semaphore, #tpu.memory_space<semaphore_mem>>
      tpu.enqueue_dma source(%102 : memref<1x128xf32, #tpu.memory_space<any>>) target(%104 : memref<1x128xf32, #tpu.memory_space<vmem>>) target_semaphore(%106 : memref<!tpu.dma_semaphore, #tpu.memory_space<semaphore_mem>>)
      %c7_i32 = arith.constant 7 : i32
      %107 = arith.addi %36, %c7_i32 : i32
      %108 = arith.index_cast %107 : i32 to index
      %109 = memref.load %arg2[%108] : memref<64xi32, #tpu.memory_space<smem>>
      %c0_i32_53 = arith.constant 0 : i32
      %c63_i32_54 = arith.constant 63 : i32
      %110 = arith.maxsi %c0_i32_53, %109 : i32
      %111 = arith.minsi %c63_i32_54, %110 : i32
      %c0_i32_55 = arith.constant 0 : i32
      %112 = tpu.memref_slice %arg7[%111, %c0_i32_55] : memref<64x128xf32, #tpu.memory_space<any>> -> memref<1x128xf32, #tpu.memory_space<any>>
      %c7_i32_56 = arith.constant 7 : i32
      %c0_i32_57 = arith.constant 0 : i32
      %113 = tpu.memref_slice %arg9[%9, %c7_i32_56, %c0_i32_57] : memref<2x8x128xf32, #tpu.memory_space<vmem>> -> memref<1x1x128xf32, #tpu.memory_space<vmem>>
      %114 = tpu.memref_squeeze %113 : memref<1x1x128xf32, #tpu.memory_space<vmem>> -> memref<1x128xf32, #tpu.memory_space<vmem>>
      %115 = tpu.memref_slice %arg12[%9] : memref<2x!tpu.dma_semaphore, #tpu.memory_space<semaphore_mem>> -> memref<1x!tpu.dma_semaphore, #tpu.memory_space<semaphore_mem>>
      %116 = tpu.memref_squeeze %115 : memref<1x!tpu.dma_semaphore, #tpu.memory_space<semaphore_mem>> -> memref<!tpu.dma_semaphore, #tpu.memory_space<semaphore_mem>>
      tpu.enqueue_dma source(%112 : memref<1x128xf32, #tpu.memory_space<any>>) target(%114 : memref<1x128xf32, #tpu.memory_space<vmem>>) target_semaphore(%116 : memref<!tpu.dma_semaphore, #tpu.memory_space<semaphore_mem>>)
    } else {
    }
    %c1_i32_5 = arith.constant 1 : i32
    %18 = arith.addi %arg1, %c1_i32_5 : i32
    %c4_i32 = arith.constant 4 : i32
    %19 = arith.cmpi slt, %18, %c4_i32 : i32
    %c1_i32_6 = arith.constant 1 : i32
    %20 = arith.addi %arg1, %c1_i32_6 : i32
    %c8_i32_7 = arith.constant 8 : i32
    %21 = arith.muli %20, %c8_i32_7 : i32
    %22 = arith.cmpi slt, %21, %11 : i32
    %23 = arith.andi %19, %22 : i1
    %24 = arith.extui %23 : i1 to i32
    %c0_i32_8 = arith.constant 0 : i32
    %25 = arith.cmpi ne, %24, %c0_i32_8 : i32
    scf.if %25 {
      %c1_i32_13 = arith.constant 1 : i32
      %34 = arith.subi %c1_i32_13, %9 : i32
      %c1_i32_14 = arith.constant 1 : i32
      %35 = arith.addi %arg1, %c1_i32_14 : i32
      %c32_i32 = arith.constant 32 : i32
      %36 = arith.muli %arg0, %c32_i32 : i32
      %c8_i32_15 = arith.constant 8 : i32
      %37 = arith.muli %35, %c8_i32_15 : i32
      %38 = arith.addi %36, %37 : i32
      %c0_i32_16 = arith.constant 0 : i32
      %39 = arith.addi %38, %c0_i32_16 : i32
      %40 = arith.index_cast %39 : i32 to index
      %41 = memref.load %arg2[%40] : memref<64xi32, #tpu.memory_space<smem>>
      %c0_i32_17 = arith.constant 0 : i32
      %c63_i32 = arith.constant 63 : i32
      %42 = arith.maxsi %c0_i32_17, %41 : i32
      %43 = arith.minsi %c63_i32, %42 : i32
      %c0_i32_18 = arith.constant 0 : i32
      %44 = tpu.memref_slice %arg7[%43, %c0_i32_18] : memref<64x128xf32, #tpu.memory_space<any>> -> memref<1x128xf32, #tpu.memory_space<any>>
      %c0_i32_19 = arith.constant 0 : i32
      %c0_i32_20 = arith.constant 0 : i32
      %45 = tpu.memref_slice %arg9[%34, %c0_i32_19, %c0_i32_20] : memref<2x8x128xf32, #tpu.memory_space<vmem>> -> memref<1x1x128xf32, #tpu.memory_space<vmem>>
      %46 = tpu.memref_squeeze %45 : memref<1x1x128xf32, #tpu.memory_space<vmem>> -> memref<1x128xf32, #tpu.memory_space<vmem>>
      %47 = tpu.memref_slice %arg12[%34] : memref<2x!tpu.dma_semaphore, #tpu.memory_space<semaphore_mem>> -> memref<1x!tpu.dma_semaphore, #tpu.memory_space<semaphore_mem>>
      %48 = tpu.memref_squeeze %47 : memref<1x!tpu.dma_semaphore, #tpu.memory_space<semaphore_mem>> -> memref<!tpu.dma_semaphore, #tpu.memory_space<semaphore_mem>>
      tpu.enqueue_dma source(%44 : memref<1x128xf32, #tpu.memory_space<any>>) target(%46 : memref<1x128xf32, #tpu.memory_space<vmem>>) target_semaphore(%48 : memref<!tpu.dma_semaphore, #tpu.memory_space<semaphore_mem>>)
      %c1_i32_21 = arith.constant 1 : i32
      %49 = arith.addi %38, %c1_i32_21 : i32
      %50 = arith.index_cast %49 : i32 to index
      %51 = memref.load %arg2[%50] : memref<64xi32, #tpu.memory_space<smem>>
      %c0_i32_22 = arith.constant 0 : i32
      %c63_i32_23 = arith.constant 63 : i32
      %52 = arith.maxsi %c0_i32_22, %51 : i32
      %53 = arith.minsi %c63_i32_23, %52 : i32
      %c0_i32_24 = arith.constant 0 : i32
      %54 = tpu.memref_slice %arg7[%53, %c0_i32_24] : memref<64x128xf32, #tpu.memory_space<any>> -> memref<1x128xf32, #tpu.memory_space<any>>
      %c1_i32_25 = arith.constant 1 : i32
      %c0_i32_26 = arith.constant 0 : i32
      %55 = tpu.memref_slice %arg9[%34, %c1_i32_25, %c0_i32_26] : memref<2x8x128xf32, #tpu.memory_space<vmem>> -> memref<1x1x128xf32, #tpu.memory_space<vmem>>
      %56 = tpu.memref_squeeze %55 : memref<1x1x128xf32, #tpu.memory_space<vmem>> -> memref<1x128xf32, #tpu.memory_space<vmem>>
      %57 = tpu.memref_slice %arg12[%34] : memref<2x!tpu.dma_semaphore, #tpu.memory_space<semaphore_mem>> -> memref<1x!tpu.dma_semaphore, #tpu.memory_space<semaphore_mem>>
      %58 = tpu.memref_squeeze %57 : memref<1x!tpu.dma_semaphore, #tpu.memory_space<semaphore_mem>> -> memref<!tpu.dma_semaphore, #tpu.memory_space<semaphore_mem>>
      tpu.enqueue_dma source(%54 : memref<1x128xf32, #tpu.memory_space<any>>) target(%56 : memref<1x128xf32, #tpu.memory_space<vmem>>) target_semaphore(%58 : memref<!tpu.dma_semaphore, #tpu.memory_space<semaphore_mem>>)
      %c2_i32_27 = arith.constant 2 : i32
      %59 = arith.addi %38, %c2_i32_27 : i32
      %60 = arith.index_cast %59 : i32 to index
      %61 = memref.load %arg2[%60] : memref<64xi32, #tpu.memory_space<smem>>
      %c0_i32_28 = arith.constant 0 : i32
      %c63_i32_29 = arith.constant 63 : i32
      %62 = arith.maxsi %c0_i32_28, %61 : i32
      %63 = arith.minsi %c63_i32_29, %62 : i32
      %c0_i32_30 = arith.constant 0 : i32
      %64 = tpu.memref_slice %arg7[%63, %c0_i32_30] : memref<64x128xf32, #tpu.memory_space<any>> -> memref<1x128xf32, #tpu.memory_space<any>>
      %c2_i32_31 = arith.constant 2 : i32
      %c0_i32_32 = arith.constant 0 : i32
      %65 = tpu.memref_slice %arg9[%34, %c2_i32_31, %c0_i32_32] : memref<2x8x128xf32, #tpu.memory_space<vmem>> -> memref<1x1x128xf32, #tpu.memory_space<vmem>>
      %66 = tpu.memref_squeeze %65 : memref<1x1x128xf32, #tpu.memory_space<vmem>> -> memref<1x128xf32, #tpu.memory_space<vmem>>
      %67 = tpu.memref_slice %arg12[%34] : memref<2x!tpu.dma_semaphore, #tpu.memory_space<semaphore_mem>> -> memref<1x!tpu.dma_semaphore, #tpu.memory_space<semaphore_mem>>
      %68 = tpu.memref_squeeze %67 : memref<1x!tpu.dma_semaphore, #tpu.memory_space<semaphore_mem>> -> memref<!tpu.dma_semaphore, #tpu.memory_space<semaphore_mem>>
      tpu.enqueue_dma source(%64 : memref<1x128xf32, #tpu.memory_space<any>>) target(%66 : memref<1x128xf32, #tpu.memory_space<vmem>>) target_semaphore(%68 : memref<!tpu.dma_semaphore, #tpu.memory_space<semaphore_mem>>)
      %c3_i32_33 = arith.constant 3 : i32
      %69 = arith.addi %38, %c3_i32_33 : i32
      %70 = arith.index_cast %69 : i32 to index
      %71 = memref.load %arg2[%70] : memref<64xi32, #tpu.memory_space<smem>>
      %c0_i32_34 = arith.constant 0 : i32
      %c63_i32_35 = arith.constant 63 : i32
      %72 = arith.maxsi %c0_i32_34, %71 : i32
      %73 = arith.minsi %c63_i32_35, %72 : i32
      %c0_i32_36 = arith.constant 0 : i32
      %74 = tpu.memref_slice %arg7[%73, %c0_i32_36] : memref<64x128xf32, #tpu.memory_space<any>> -> memref<1x128xf32, #tpu.memory_space<any>>
      %c3_i32_37 = arith.constant 3 : i32
      %c0_i32_38 = arith.constant 0 : i32
      %75 = tpu.memref_slice %arg9[%34, %c3_i32_37, %c0_i32_38] : memref<2x8x128xf32, #tpu.memory_space<vmem>> -> memref<1x1x128xf32, #tpu.memory_space<vmem>>
      %76 = tpu.memref_squeeze %75 : memref<1x1x128xf32, #tpu.memory_space<vmem>> -> memref<1x128xf32, #tpu.memory_space<vmem>>
      %77 = tpu.memref_slice %arg12[%34] : memref<2x!tpu.dma_semaphore, #tpu.memory_space<semaphore_mem>> -> memref<1x!tpu.dma_semaphore, #tpu.memory_space<semaphore_mem>>
      %78 = tpu.memref_squeeze %77 : memref<1x!tpu.dma_semaphore, #tpu.memory_space<semaphore_mem>> -> memref<!tpu.dma_semaphore, #tpu.memory_space<semaphore_mem>>
      tpu.enqueue_dma source(%74 : memref<1x128xf32, #tpu.memory_space<any>>) target(%76 : memref<1x128xf32, #tpu.memory_space<vmem>>) target_semaphore(%78 : memref<!tpu.dma_semaphore, #tpu.memory_space<semaphore_mem>>)
      %c4_i32_39 = arith.constant 4 : i32
      %79 = arith.addi %38, %c4_i32_39 : i32
      %80 = arith.index_cast %79 : i32 to index
      %81 = memref.load %arg2[%80] : memref<64xi32, #tpu.memory_space<smem>>
      %c0_i32_40 = arith.constant 0 : i32
      %c63_i32_41 = arith.constant 63 : i32
      %82 = arith.maxsi %c0_i32_40, %81 : i32
      %83 = arith.minsi %c63_i32_41, %82 : i32
      %c0_i32_42 = arith.constant 0 : i32
      %84 = tpu.memref_slice %arg7[%83, %c0_i32_42] : memref<64x128xf32, #tpu.memory_space<any>> -> memref<1x128xf32, #tpu.memory_space<any>>
      %c4_i32_43 = arith.constant 4 : i32
      %c0_i32_44 = arith.constant 0 : i32
      %85 = tpu.memref_slice %arg9[%34, %c4_i32_43, %c0_i32_44] : memref<2x8x128xf32, #tpu.memory_space<vmem>> -> memref<1x1x128xf32, #tpu.memory_space<vmem>>
      %86 = tpu.memref_squeeze %85 : memref<1x1x128xf32, #tpu.memory_space<vmem>> -> memref<1x128xf32, #tpu.memory_space<vmem>>
      %87 = tpu.memref_slice %arg12[%34] : memref<2x!tpu.dma_semaphore, #tpu.memory_space<semaphore_mem>> -> memref<1x!tpu.dma_semaphore, #tpu.memory_space<semaphore_mem>>
      %88 = tpu.memref_squeeze %87 : memref<1x!tpu.dma_semaphore, #tpu.memory_space<semaphore_mem>> -> memref<!tpu.dma_semaphore, #tpu.memory_space<semaphore_mem>>
      tpu.enqueue_dma source(%84 : memref<1x128xf32, #tpu.memory_space<any>>) target(%86 : memref<1x128xf32, #tpu.memory_space<vmem>>) target_semaphore(%88 : memref<!tpu.dma_semaphore, #tpu.memory_space<semaphore_mem>>)
      %c5_i32 = arith.constant 5 : i32
      %89 = arith.addi %38, %c5_i32 : i32
      %90 = arith.index_cast %89 : i32 to index
      %91 = memref.load %arg2[%90] : memref<64xi32, #tpu.memory_space<smem>>
      %c0_i32_45 = arith.constant 0 : i32
      %c63_i32_46 = arith.constant 63 : i32
      %92 = arith.maxsi %c0_i32_45, %91 : i32
      %93 = arith.minsi %c63_i32_46, %92 : i32
      %c0_i32_47 = arith.constant 0 : i32
      %94 = tpu.memref_slice %arg7[%93, %c0_i32_47] : memref<64x128xf32, #tpu.memory_space<any>> -> memref<1x128xf32, #tpu.memory_space<any>>
      %c5_i32_48 = arith.constant 5 : i32
      %c0_i32_49 = arith.constant 0 : i32
      %95 = tpu.memref_slice %arg9[%34, %c5_i32_48, %c0_i32_49] : memref<2x8x128xf32, #tpu.memory_space<vmem>> -> memref<1x1x128xf32, #tpu.memory_space<vmem>>
      %96 = tpu.memref_squeeze %95 : memref<1x1x128xf32, #tpu.memory_space<vmem>> -> memref<1x128xf32, #tpu.memory_space<vmem>>
      %97 = tpu.memref_slice %arg12[%34] : memref<2x!tpu.dma_semaphore, #tpu.memory_space<semaphore_mem>> -> memref<1x!tpu.dma_semaphore, #tpu.memory_space<semaphore_mem>>
      %98 = tpu.memref_squeeze %97 : memref<1x!tpu.dma_semaphore, #tpu.memory_space<semaphore_mem>> -> memref<!tpu.dma_semaphore, #tpu.memory_space<semaphore_mem>>
      tpu.enqueue_dma source(%94 : memref<1x128xf32, #tpu.memory_space<any>>) target(%96 : memref<1x128xf32, #tpu.memory_space<vmem>>) target_semaphore(%98 : memref<!tpu.dma_semaphore, #tpu.memory_space<semaphore_mem>>)
      %c6_i32 = arith.constant 6 : i32
      %99 = arith.addi %38, %c6_i32 : i32
      %100 = arith.index_cast %99 : i32 to index
      %101 = memref.load %arg2[%100] : memref<64xi32, #tpu.memory_space<smem>>
      %c0_i32_50 = arith.constant 0 : i32
      %c63_i32_51 = arith.constant 63 : i32
      %102 = arith.maxsi %c0_i32_50, %101 : i32
      %103 = arith.minsi %c63_i32_51, %102 : i32
      %c0_i32_52 = arith.constant 0 : i32
      %104 = tpu.memref_slice %arg7[%103, %c0_i32_52] : memref<64x128xf32, #tpu.memory_space<any>> -> memref<1x128xf32, #tpu.memory_space<any>>
      %c6_i32_53 = arith.constant 6 : i32
      %c0_i32_54 = arith.constant 0 : i32
      %105 = tpu.memref_slice %arg9[%34, %c6_i32_53, %c0_i32_54] : memref<2x8x128xf32, #tpu.memory_space<vmem>> -> memref<1x1x128xf32, #tpu.memory_space<vmem>>
      %106 = tpu.memref_squeeze %105 : memref<1x1x128xf32, #tpu.memory_space<vmem>> -> memref<1x128xf32, #tpu.memory_space<vmem>>
      %107 = tpu.memref_slice %arg12[%34] : memref<2x!tpu.dma_semaphore, #tpu.memory_space<semaphore_mem>> -> memref<1x!tpu.dma_semaphore, #tpu.memory_space<semaphore_mem>>
      %108 = tpu.memref_squeeze %107 : memref<1x!tpu.dma_semaphore, #tpu.memory_space<semaphore_mem>> -> memref<!tpu.dma_semaphore, #tpu.memory_space<semaphore_mem>>
      tpu.enqueue_dma source(%104 : memref<1x128xf32, #tpu.memory_space<any>>) target(%106 : memref<1x128xf32, #tpu.memory_space<vmem>>) target_semaphore(%108 : memref<!tpu.dma_semaphore, #tpu.memory_space<semaphore_mem>>)
      %c7_i32 = arith.constant 7 : i32
      %109 = arith.addi %38, %c7_i32 : i32
      %110 = arith.index_cast %109 : i32 to index
      %111 = memref.load %arg2[%110] : memref<64xi32, #tpu.memory_space<smem>>
      %c0_i32_55 = arith.constant 0 : i32
      %c63_i32_56 = arith.constant 63 : i32
      %112 = arith.maxsi %c0_i32_55, %111 : i32
      %113 = arith.minsi %c63_i32_56, %112 : i32
      %c0_i32_57 = arith.constant 0 : i32
      %114 = tpu.memref_slice %arg7[%113, %c0_i32_57] : memref<64x128xf32, #tpu.memory_space<any>> -> memref<1x128xf32, #tpu.memory_space<any>>
      %c7_i32_58 = arith.constant 7 : i32
      %c0_i32_59 = arith.constant 0 : i32
      %115 = tpu.memref_slice %arg9[%34, %c7_i32_58, %c0_i32_59] : memref<2x8x128xf32, #tpu.memory_space<vmem>> -> memref<1x1x128xf32, #tpu.memory_space<vmem>>
      %116 = tpu.memref_squeeze %115 : memref<1x1x128xf32, #tpu.memory_space<vmem>> -> memref<1x128xf32, #tpu.memory_space<vmem>>
      %117 = tpu.memref_slice %arg12[%34] : memref<2x!tpu.dma_semaphore, #tpu.memory_space<semaphore_mem>> -> memref<1x!tpu.dma_semaphore, #tpu.memory_space<semaphore_mem>>
      %118 = tpu.memref_squeeze %117 : memref<1x!tpu.dma_semaphore, #tpu.memory_space<semaphore_mem>> -> memref<!tpu.dma_semaphore, #tpu.memory_space<semaphore_mem>>
      tpu.enqueue_dma source(%114 : memref<1x128xf32, #tpu.memory_space<any>>) target(%116 : memref<1x128xf32, #tpu.memory_space<vmem>>) target_semaphore(%118 : memref<!tpu.dma_semaphore, #tpu.memory_space<semaphore_mem>>)
    } else {
    }
    %c0_i32_9 = arith.constant 0 : i32
    %26 = arith.cmpi eq, %arg1, %c0_i32_9 : i32
    %27 = arith.extui %26 : i1 to i32
    %c0_i32_10 = arith.constant 0 : i32
    %28 = arith.cmpi ne, %27, %c0_i32_10 : i32
    scf.if %28 {
      %cst = arith.constant 0.000000e+00 : f32
      %34 = vector.broadcast %cst : f32 to vector<1x128xf32>
      %c0 = arith.constant 0 : index
      %c0_13 = arith.constant 0 : index
      %35 = vector.load %arg10[%c0, %c0_13] : memref<1x128xf32, #tpu.memory_space<vmem>>, vector<1x128xf32>
      tpu.vector_store %arg10[%c0, %c0_13], %34 {strides = array<i32>} : memref<1x128xf32, #tpu.memory_space<vmem>>, vector<1x128xf32>,
      %cst_14 = arith.constant 0.000000e+00 : f32
      %36 = vector.broadcast %cst_14 : f32 to vector<1x1xf32>
      %c0_15 = arith.constant 0 : index
      %c0_16 = arith.constant 0 : index
      %37 = vector.load %arg11[%c0_15, %c0_16] : memref<1x1xf32, #tpu.memory_space<vmem>>, vector<1x1xf32>
      tpu.vector_store %arg11[%c0_15, %c0_16], %36 {strides = array<i32>} : memref<1x1xf32, #tpu.memory_space<vmem>>, vector<1x1xf32>,
    } else {
    }
    %29 = arith.extui %13 : i1 to i32
    %c0_i32_11 = arith.constant 0 : i32
    %30 = arith.cmpi ne, %29, %c0_i32_11 : i32
    scf.if %30 {
      %c0_i32_13 = arith.constant 0 : i32
      %c0_i32_14 = arith.constant 0 : i32
      %34 = tpu.memref_slice %arg7[%c0_i32_13, %c0_i32_14] : memref<64x128xf32, #tpu.memory_space<any>> -> memref<1x128xf32, #tpu.memory_space<any>>
      %c0_i32_15 = arith.constant 0 : i32
      %c0_i32_16 = arith.constant 0 : i32
      %35 = tpu.memref_slice %arg9[%9, %c0_i32_15, %c0_i32_16] : memref<2x8x128xf32, #tpu.memory_space<vmem>> -> memref<1x1x128xf32, #tpu.memory_space<vmem>>
      %36 = tpu.memref_squeeze %35 : memref<1x1x128xf32, #tpu.memory_space<vmem>> -> memref<1x128xf32, #tpu.memory_space<vmem>>
      %37 = tpu.memref_slice %arg12[%9] : memref<2x!tpu.dma_semaphore, #tpu.memory_space<semaphore_mem>> -> memref<1x!tpu.dma_semaphore, #tpu.memory_space<semaphore_mem>>
      %38 = tpu.memref_squeeze %37 : memref<1x!tpu.dma_semaphore, #tpu.memory_space<semaphore_mem>> -> memref<!tpu.dma_semaphore, #tpu.memory_space<semaphore_mem>>
      tpu.wait_dma2 semaphore(%38 : memref<!tpu.dma_semaphore, #tpu.memory_space<semaphore_mem>>) src(%34 : memref<1x128xf32, #tpu.memory_space<any>>) dst(%36 : memref<1x128xf32, #tpu.memory_space<vmem>>)
      %c0_i32_17 = arith.constant 0 : i32
      %c0_i32_18 = arith.constant 0 : i32
      %39 = tpu.memref_slice %arg7[%c0_i32_17, %c0_i32_18] : memref<64x128xf32, #tpu.memory_space<any>> -> memref<1x128xf32, #tpu.memory_space<any>>
      %c1_i32_19 = arith.constant 1 : i32
      %c0_i32_20 = arith.constant 0 : i32
      %40 = tpu.memref_slice %arg9[%9, %c1_i32_19, %c0_i32_20] : memref<2x8x128xf32, #tpu.memory_space<vmem>> -> memref<1x1x128xf32, #tpu.memory_space<vmem>>
      %41 = tpu.memref_squeeze %40 : memref<1x1x128xf32, #tpu.memory_space<vmem>> -> memref<1x128xf32, #tpu.memory_space<vmem>>
      %42 = tpu.memref_slice %arg12[%9] : memref<2x!tpu.dma_semaphore, #tpu.memory_space<semaphore_mem>> -> memref<1x!tpu.dma_semaphore, #tpu.memory_space<semaphore_mem>>
      %43 = tpu.memref_squeeze %42 : memref<1x!tpu.dma_semaphore, #tpu.memory_space<semaphore_mem>> -> memref<!tpu.dma_semaphore, #tpu.memory_space<semaphore_mem>>
      tpu.wait_dma2 semaphore(%43 : memref<!tpu.dma_semaphore, #tpu.memory_space<semaphore_mem>>) src(%39 : memref<1x128xf32, #tpu.memory_space<any>>) dst(%41 : memref<1x128xf32, #tpu.memory_space<vmem>>)
      %c0_i32_21 = arith.constant 0 : i32
      %c0_i32_22 = arith.constant 0 : i32
      %44 = tpu.memref_slice %arg7[%c0_i32_21, %c0_i32_22] : memref<64x128xf32, #tpu.memory_space<any>> -> memref<1x128xf32, #tpu.memory_space<any>>
      %c2_i32_23 = arith.constant 2 : i32
      %c0_i32_24 = arith.constant 0 : i32
      %45 = tpu.memref_slice %arg9[%9, %c2_i32_23, %c0_i32_24] : memref<2x8x128xf32, #tpu.memory_space<vmem>> -> memref<1x1x128xf32, #tpu.memory_space<vmem>>
      %46 = tpu.memref_squeeze %45 : memref<1x1x128xf32, #tpu.memory_space<vmem>> -> memref<1x128xf32, #tpu.memory_space<vmem>>
      %47 = tpu.memref_slice %arg12[%9] : memref<2x!tpu.dma_semaphore, #tpu.memory_space<semaphore_mem>> -> memref<1x!tpu.dma_semaphore, #tpu.memory_space<semaphore_mem>>
      %48 = tpu.memref_squeeze %47 : memref<1x!tpu.dma_semaphore, #tpu.memory_space<semaphore_mem>> -> memref<!tpu.dma_semaphore, #tpu.memory_space<semaphore_mem>>
      tpu.wait_dma2 semaphore(%48 : memref<!tpu.dma_semaphore, #tpu.memory_space<semaphore_mem>>) src(%44 : memref<1x128xf32, #tpu.memory_space<any>>) dst(%46 : memref<1x128xf32, #tpu.memory_space<vmem>>)
      %c0_i32_25 = arith.constant 0 : i32
      %c0_i32_26 = arith.constant 0 : i32
      %49 = tpu.memref_slice %arg7[%c0_i32_25, %c0_i32_26] : memref<64x128xf32, #tpu.memory_space<any>> -> memref<1x128xf32, #tpu.memory_space<any>>
      %c3_i32_27 = arith.constant 3 : i32
      %c0_i32_28 = arith.constant 0 : i32
      %50 = tpu.memref_slice %arg9[%9, %c3_i32_27, %c0_i32_28] : memref<2x8x128xf32, #tpu.memory_space<vmem>> -> memref<1x1x128xf32, #tpu.memory_space<vmem>>
      %51 = tpu.memref_squeeze %50 : memref<1x1x128xf32, #tpu.memory_space<vmem>> -> memref<1x128xf32, #tpu.memory_space<vmem>>
      %52 = tpu.memref_slice %arg12[%9] : memref<2x!tpu.dma_semaphore, #tpu.memory_space<semaphore_mem>> -> memref<1x!tpu.dma_semaphore, #tpu.memory_space<semaphore_mem>>
      %53 = tpu.memref_squeeze %52 : memref<1x!tpu.dma_semaphore, #tpu.memory_space<semaphore_mem>> -> memref<!tpu.dma_semaphore, #tpu.memory_space<semaphore_mem>>
      tpu.wait_dma2 semaphore(%53 : memref<!tpu.dma_semaphore, #tpu.memory_space<semaphore_mem>>) src(%49 : memref<1x128xf32, #tpu.memory_space<any>>) dst(%51 : memref<1x128xf32, #tpu.memory_space<vmem>>)
      %c0_i32_29 = arith.constant 0 : i32
      %c0_i32_30 = arith.constant 0 : i32
      %54 = tpu.memref_slice %arg7[%c0_i32_29, %c0_i32_30] : memref<64x128xf32, #tpu.memory_space<any>> -> memref<1x128xf32, #tpu.memory_space<any>>
      %c4_i32_31 = arith.constant 4 : i32
      %c0_i32_32 = arith.constant 0 : i32
      %55 = tpu.memref_slice %arg9[%9, %c4_i32_31, %c0_i32_32] : memref<2x8x128xf32, #tpu.memory_space<vmem>> -> memref<1x1x128xf32, #tpu.memory_space<vmem>>
      %56 = tpu.memref_squeeze %55 : memref<1x1x128xf32, #tpu.memory_space<vmem>> -> memref<1x128xf32, #tpu.memory_space<vmem>>
      %57 = tpu.memref_slice %arg12[%9] : memref<2x!tpu.dma_semaphore, #tpu.memory_space<semaphore_mem>> -> memref<1x!tpu.dma_semaphore, #tpu.memory_space<semaphore_mem>>
      %58 = tpu.memref_squeeze %57 : memref<1x!tpu.dma_semaphore, #tpu.memory_space<semaphore_mem>> -> memref<!tpu.dma_semaphore, #tpu.memory_space<semaphore_mem>>
      tpu.wait_dma2 semaphore(%58 : memref<!tpu.dma_semaphore, #tpu.memory_space<semaphore_mem>>) src(%54 : memref<1x128xf32, #tpu.memory_space<any>>) dst(%56 : memref<1x128xf32, #tpu.memory_space<vmem>>)
      %c0_i32_33 = arith.constant 0 : i32
      %c0_i32_34 = arith.constant 0 : i32
      %59 = tpu.memref_slice %arg7[%c0_i32_33, %c0_i32_34] : memref<64x128xf32, #tpu.memory_space<any>> -> memref<1x128xf32, #tpu.memory_space<any>>
      %c5_i32 = arith.constant 5 : i32
      %c0_i32_35 = arith.constant 0 : i32
      %60 = tpu.memref_slice %arg9[%9, %c5_i32, %c0_i32_35] : memref<2x8x128xf32, #tpu.memory_space<vmem>> -> memref<1x1x128xf32, #tpu.memory_space<vmem>>
      %61 = tpu.memref_squeeze %60 : memref<1x1x128xf32, #tpu.memory_space<vmem>> -> memref<1x128xf32, #tpu.memory_space<vmem>>
      %62 = tpu.memref_slice %arg12[%9] : memref<2x!tpu.dma_semaphore, #tpu.memory_space<semaphore_mem>> -> memref<1x!tpu.dma_semaphore, #tpu.memory_space<semaphore_mem>>
      %63 = tpu.memref_squeeze %62 : memref<1x!tpu.dma_semaphore, #tpu.memory_space<semaphore_mem>> -> memref<!tpu.dma_semaphore, #tpu.memory_space<semaphore_mem>>
      tpu.wait_dma2 semaphore(%63 : memref<!tpu.dma_semaphore, #tpu.memory_space<semaphore_mem>>) src(%59 : memref<1x128xf32, #tpu.memory_space<any>>) dst(%61 : memref<1x128xf32, #tpu.memory_space<vmem>>)
      %c0_i32_36 = arith.constant 0 : i32
      %c0_i32_37 = arith.constant 0 : i32
      %64 = tpu.memref_slice %arg7[%c0_i32_36, %c0_i32_37] : memref<64x128xf32, #tpu.memory_space<any>> -> memref<1x128xf32, #tpu.memory_space<any>>
      %c6_i32 = arith.constant 6 : i32
      %c0_i32_38 = arith.constant 0 : i32
      %65 = tpu.memref_slice %arg9[%9, %c6_i32, %c0_i32_38] : memref<2x8x128xf32, #tpu.memory_space<vmem>> -> memref<1x1x128xf32, #tpu.memory_space<vmem>>
      %66 = tpu.memref_squeeze %65 : memref<1x1x128xf32, #tpu.memory_space<vmem>> -> memref<1x128xf32, #tpu.memory_space<vmem>>
      %67 = tpu.memref_slice %arg12[%9] : memref<2x!tpu.dma_semaphore, #tpu.memory_space<semaphore_mem>> -> memref<1x!tpu.dma_semaphore, #tpu.memory_space<semaphore_mem>>
      %68 = tpu.memref_squeeze %67 : memref<1x!tpu.dma_semaphore, #tpu.memory_space<semaphore_mem>> -> memref<!tpu.dma_semaphore, #tpu.memory_space<semaphore_mem>>
      tpu.wait_dma2 semaphore(%68 : memref<!tpu.dma_semaphore, #tpu.memory_space<semaphore_mem>>) src(%64 : memref<1x128xf32, #tpu.memory_space<any>>) dst(%66 : memref<1x128xf32, #tpu.memory_space<vmem>>)
      %c0_i32_39 = arith.constant 0 : i32
      %c0_i32_40 = arith.constant 0 : i32
      %69 = tpu.memref_slice %arg7[%c0_i32_39, %c0_i32_40] : memref<64x128xf32, #tpu.memory_space<any>> -> memref<1x128xf32, #tpu.memory_space<any>>
      %c7_i32 = arith.constant 7 : i32
      %c0_i32_41 = arith.constant 0 : i32
      %70 = tpu.memref_slice %arg9[%9, %c7_i32, %c0_i32_41] : memref<2x8x128xf32, #tpu.memory_space<vmem>> -> memref<1x1x128xf32, #tpu.memory_space<vmem>>
      %71 = tpu.memref_squeeze %70 : memref<1x1x128xf32, #tpu.memory_space<vmem>> -> memref<1x128xf32, #tpu.memory_space<vmem>>
      %72 = tpu.memref_slice %arg12[%9] : memref<2x!tpu.dma_semaphore, #tpu.memory_space<semaphore_mem>> -> memref<1x!tpu.dma_semaphore, #tpu.memory_space<semaphore_mem>>
      %73 = tpu.memref_squeeze %72 : memref<1x!tpu.dma_semaphore, #tpu.memory_space<semaphore_mem>> -> memref<!tpu.dma_semaphore, #tpu.memory_space<semaphore_mem>>
      tpu.wait_dma2 semaphore(%73 : memref<!tpu.dma_semaphore, #tpu.memory_space<semaphore_mem>>) src(%69 : memref<1x128xf32, #tpu.memory_space<any>>) dst(%71 : memref<1x128xf32, #tpu.memory_space<vmem>>)
      %74 = arith.index_cast %9 : i32 to index
      %c0 = arith.constant 0 : index
      %c0_42 = arith.constant 0 : index
      %75 = vector.load %arg9[%74, %c0, %c0_42] : memref<2x8x128xf32, #tpu.memory_space<vmem>>, vector<1x8x128xf32>
      %76 = vector.shape_cast %75 : vector<1x8x128xf32> to vector<8x128xf32>
      %c8_i32_43 = arith.constant 8 : i32
      %77 = arith.muli %arg1, %c8_i32_43 : i32
      %78 = tpu.assume_multiple %77, 8 : i32
      %c0_44 = arith.constant 0 : index
      %79 = arith.index_cast %78 : i32 to index
      %c0_45 = arith.constant 0 : index
      %80 = vector.load %arg4[%c0_44, %79, %c0_45] : memref<1x32x1xf32, #tpu.memory_space<vmem>>, vector<1x8x1xf32>
      %81 = vector.shape_cast %80 : vector<1x8x1xf32> to vector<8x1xf32>
      %c0_46 = arith.constant 0 : index
      %c0_47 = arith.constant 0 : index
      %82 = vector.load %arg10[%c0_46, %c0_47] : memref<1x128xf32, #tpu.memory_space<vmem>>, vector<1x128xf32>
      %83 = vector.broadcast %81 : vector<8x1xf32> to vector<8x128xf32>
      %84 = arith.mulf %76, %83 : vector<8x128xf32>
      %cst = arith.constant dense<0.000000e+00> : vector<128xf32>
      %85 = vector.multi_reduction <add>, %84, %cst [0] : vector<8x128xf32> to vector<128xf32>
      %86 = vector.shape_cast %85 : vector<128xf32> to vector<1x128xf32>
      %87 = arith.addf %82, %86 : vector<1x128xf32>
      %c0_48 = arith.constant 0 : index
      %c0_49 = arith.constant 0 : index
      %88 = vector.load %arg10[%c0_48, %c0_49] : memref<1x128xf32, #tpu.memory_space<vmem>>, vector<1x128xf32>
      tpu.vector_store %arg10[%c0_48, %c0_49], %87 {strides = array<i32>} : memref<1x128xf32, #tpu.memory_space<vmem>>, vector<1x128xf32>,
      %c0_50 = arith.constant 0 : index
      %c0_51 = arith.constant 0 : index
      %89 = vector.load %arg11[%c0_50, %c0_51] : memref<1x1xf32, #tpu.memory_space<vmem>>, vector<1x1xf32>
      %cst_52 = arith.constant dense<0.000000e+00> : vector<1xf32>
      %90 = vector.multi_reduction <add>, %81, %cst_52 [0] : vector<8x1xf32> to vector<1xf32>
      %91 = vector.shape_cast %90 : vector<1xf32> to vector<1x1xf32>
      %92 = arith.addf %89, %91 : vector<1x1xf32>
      %c0_53 = arith.constant 0 : index
      %c0_54 = arith.constant 0 : index
      %93 = vector.load %arg11[%c0_53, %c0_54] : memref<1x1xf32, #tpu.memory_space<vmem>>, vector<1x1xf32>
      tpu.vector_store %arg11[%c0_53, %c0_54], %92 {strides = array<i32>} : memref<1x1xf32, #tpu.memory_space<vmem>>, vector<1x1xf32>,
    } else {
    }
    %c3_i32 = arith.constant 3 : i32
    %31 = arith.cmpi eq, %arg1, %c3_i32 : i32
    %32 = arith.extui %31 : i1 to i32
    %c0_i32_12 = arith.constant 0 : i32
    %33 = arith.cmpi ne, %32, %c0_i32_12 : i32
    scf.if %33 {
      %c0 = arith.constant 0 : index
      %c0_13 = arith.constant 0 : index
      %34 = vector.load %arg10[%c0, %c0_13] : memref<1x128xf32, #tpu.memory_space<vmem>>, vector<1x128xf32>
      %c0_14 = arith.constant 0 : index
      %c0_15 = arith.constant 0 : index
      %35 = vector.load %arg5[%c0_14, %c0_15] : memref<1x128xf32, #tpu.memory_space<vmem>>, vector<1x128xf32>
      %36 = arith.mulf %34, %35 : vector<1x128xf32>
      %cst = arith.constant dense<0.000000e+00> : vector<1xf32>
      %37 = vector.multi_reduction <add>, %36, %cst [1] : vector<1x128xf32> to vector<1xf32>
      %38 = vector.shape_cast %37 : vector<1xf32> to vector<1x1xf32>
      %c0_16 = arith.constant 0 : index
      %c0_17 = arith.constant 0 : index
      %39 = vector.load %arg11[%c0_16, %c0_17] : memref<1x1xf32, #tpu.memory_space<vmem>>, vector<1x1xf32>
      %cst_18 = arith.constant 1.000000e+00 : f32
      %40 = vector.broadcast %cst_18 : f32 to vector<1x1xf32>
      %41 = arith.maximumf %39, %40 : vector<1x1xf32>
      %42 = arith.divf %38, %41 : vector<1x1xf32>
      %c0_19 = arith.constant 0 : index
      %c0_20 = arith.constant 0 : index
      %43 = memref.load %arg6[%c0_19, %c0_20] : memref<1x1xf32, #tpu.memory_space<smem>>
      %44 = vector.broadcast %43 : f32 to vector<1x1xf32>
      %45 = arith.addf %42, %44 : vector<1x1xf32>
      %c0_21 = arith.constant 0 : index
      %c0_22 = arith.constant 0 : index
      %c0_23 = arith.constant 0 : index
      %46 = vector.load %arg8[%c0_21, %c0_22, %c0_23] : memref<1x1x1xf32, #tpu.memory_space<vmem>>, vector<1x1x1xf32>
      %47 = vector.shape_cast %46 : vector<1x1x1xf32> to vector<1x1xf32>
      %48 = vector.shape_cast %45 : vector<1x1xf32> to vector<1x1x1xf32>
      tpu.vector_store %arg8[%c0_21, %c0_22, %c0_23], %48 {strides = array<i32>} : memref<1x1x1xf32, #tpu.memory_space<vmem>>, vector<1x1x1xf32>,
    } else {
    }
    return
  }
  func.func @transform_0(%arg0: i32, %arg1: i32, %arg2: memref<64xi32, #tpu.memory_space<smem>>, %arg3: memref<2xi32, #tpu.memory_space<smem>>) -> (i32, i32, i32) {
    %c0_i32 = arith.constant 0 : i32
    %c0_i32_0 = arith.constant 0 : i32
    %c0_i32_1 = arith.constant 0 : i32
    return %arg0, %c0_i32, %c0_i32_0 : i32, i32, i32
  }
  func.func @transform_1(%arg0: i32, %arg1: i32, %arg2: memref<64xi32, #tpu.memory_space<smem>>, %arg3: memref<2xi32, #tpu.memory_space<smem>>) -> (i32, i32) {
    %c0_i32 = arith.constant 0 : i32
    %c0_i32_0 = arith.constant 0 : i32
    %c0_i32_1 = arith.constant 0 : i32
    return %c0_i32, %c0_i32_0 : i32, i32
  }
  func.func @transform_2(%arg0: i32, %arg1: i32, %arg2: memref<64xi32, #tpu.memory_space<smem>>, %arg3: memref<2xi32, #tpu.memory_space<smem>>) -> (i32, i32) {
    %c0_i32 = arith.constant 0 : i32
    %c0_i32_0 = arith.constant 0 : i32
    %c0_i32_1 = arith.constant 0 : i32
    return %c0_i32, %c0_i32_0 : i32, i32
  }
  func.func @transform_4(%arg0: i32, %arg1: i32, %arg2: memref<64xi32, #tpu.memory_space<smem>>, %arg3: memref<2xi32, #tpu.memory_space<smem>>) -> (i32, i32, i32) {
    %c0_i32 = arith.constant 0 : i32
    %c0_i32_0 = arith.constant 0 : i32
    %c0_i32_1 = arith.constant 0 : i32
    return %arg0, %c0_i32, %c0_i32_0 : i32, i32, i32
  }
}

</mosaic_0001>

<llo_original>
// kernel: tpu_custom_call.1
$region0: #{tpu_custom_call.1}
  #allocation0 [shape = 'u32[]', space=smem, size = 0x4, offset = 0x4, fixed_abs, tag = 'smem constant byte address 0x4 - core index']
  #allocation1 [shape = 'u32[144,128]{1,0:T(1,128)}', space=vmem, size = 0x12000, scoped, tag = 'internal scratch']
  #allocation2 [shape = 'f32[2,8,128]{2,1,0:T(8,128)}', space=vmem, size = 0x2000, scoped, tag = 'scratch operand']
  #allocation3 [shape = 'f32[1,128]{1,0:T(1,128)}', space=vmem, size = 0x200, scoped, tag = 'scratch operand']
  #allocation4 [shape = 'f32[1,1]{1,0:T(1,128)}', space=vmem, size = 0x200, scoped, tag = 'scratch operand']
  #allocation5 [shape = 's32[2]{0}', space=sflag, size = 0x8, scoped, tag = 'scratch operand']
  #allocation6 [shape = 's32[1]{0}', space=sflag, size = 0x4, scoped, tag = 'scoped memory for tpu_custom_call.1']
  #allocation7 [shape = 'u8[512]{0}', space=smem, size = 0x200, scoped, tag = 'prefetched SMEM operand 0']
  #allocation8 [shape = 'u8[512]{0}', space=smem, size = 0x200, scoped, tag = 'prefetched SMEM operand 1']
  #allocation9 [shape = 'f32[1,1]{1,0:T(1,128)S(6)}', space=smem, size = 0x200, scoped, tag = 'scoped memory for tpu_custom_call.1']
  #allocation10 [shape = 's32[]', space=sflag, size = 0x4, offset = 0, fixed_abs, tag = 'sflag constant byte address 0x0 - dummy sync flag']
  #allocation11 [shape = 's32[]', space=sflag, size = 0x4, offset = 0, fixed_abs, tag = 'sflag constant byte address 0x0 - dummy sync flag']
  #allocation12 [shape = 's32[]', space=sflag, size = 0x4, offset = 0, fixed_abs, tag = 'sflag constant byte address 0x0 - dummy sync flag']
  #allocation13 [shape = 's32[]', space=sflag, size = 0x4, offset = 0, fixed_abs, tag = 'sflag constant byte address 0x0 - dummy sync flag']
  #allocation14 [shape = 's32[]', space=sflag, size = 0x4, offset = 0, fixed_abs, tag = 'sflag constant byte address 0x0 - dummy sync flag']
  #allocation15 [shape = 's32[]', space=sflag, size = 0x4, offset = 0, fixed_abs, tag = 'sflag constant byte address 0x0 - dummy sync flag']
  #allocation16 [shape = 's32[]', space=sflag, size = 0x4, offset = 0, fixed_abs, tag = 'sflag constant byte address 0x0 - dummy sync flag']
  #allocation17 [shape = 's32[]', space=sflag, size = 0x4, offset = 0, fixed_abs, tag = 'sflag constant byte address 0x0 - dummy sync flag']
  #allocation18 [shape = 's32[]', space=sflag, size = 0x4, offset = 0, fixed_abs, tag = 'sflag constant byte address 0x0 - dummy sync flag']
  #allocation19 [shape = 's32[]', space=sflag, size = 0x4, offset = 0, fixed_abs, tag = 'sflag constant byte address 0x0 - dummy sync flag']
  #allocation20 [shape = 's32[]', space=sflag, size = 0x4, offset = 0, fixed_abs, tag = 'sflag constant byte address 0x0 - dummy sync flag']
  #allocation21 [shape = 's32[]', space=sflag, size = 0x4, offset = 0, fixed_abs, tag = 'sflag constant byte address 0x0 - dummy sync flag']
  #allocation22 [shape = 's32[]', space=sflag, size = 0x4, offset = 0, fixed_abs, tag = 'sflag constant byte address 0x0 - dummy sync flag']
  #allocation23 [shape = 's32[]', space=sflag, size = 0x4, offset = 0, fixed_abs, tag = 'sflag constant byte address 0x0 - dummy sync flag']
  #allocation24 [shape = 's32[]', space=sflag, size = 0x4, offset = 0, fixed_abs, tag = 'sflag constant byte address 0x0 - dummy sync flag']
  #allocation25 [shape = 's32[]', space=sflag, size = 0x4, offset = 0, fixed_abs, tag = 'sflag constant byte address 0x0 - dummy sync flag']
  %s0 = inlined_call_operand.vmem [shape: s32[64], index: 0, kind: input, shape index: {}]
  %s1 = inlined_call_operand.vmem [shape: s32[2], index: 1, kind: input, shape index: {}]
  %s2 = inlined_call_operand.vmem [shape: f32[2,32,1], index: 2, kind: input, shape index: {}]
  %s3 = inlined_call_operand.vmem [shape: f32[1,128], index: 3, kind: input, shape index: {}]
  %s4 = inlined_call_operand.<no memory space> [shape: f32[1,1], index: 4, kind: input, shape index: {}]
  %s5 = inlined_call_operand.vmem [shape: f32[64,128], index: 5, kind: input, shape index: {}]
  %s6 = inlined_call_operand.vmem [shape: f32[2,1,1], index: 6, kind: output, shape index: {}]
  %s7 = sld [smem:[#allocation0]]
  $region545: #{tpu_custom_call.1} parent=0
    _
  %s9 = ssub.s32 1, %s7
  %s10 = scalar_select 0, %s9, %s7
  %s11 = sshll.u32 %s0, 4
  %s12 = int_to_ptr.vmem [resolvable:$true] %s11
  %14 = dma.vmem_to_smem %s12, 16, [#allocation7], [#allocation6]
  %s15 = sshll.u32 %s1, 4
  %s16 = int_to_ptr.vmem [resolvable:$true] %s15
  %18 = dma.vmem_to_smem %s16, 16, [#allocation8], [#allocation6]
  %19 = sst [smem:[#allocation9]] %s4
  %20 = dma.done [#allocation6], 32
  %21 = sfence
  loop: start=0, step=1, limit=10
  $region2: #{tpu_custom_call.1} parent=0 // loop_pre_header
    _
  $region3: #{tpu_custom_call.1} parent=0 // loop_header
    %s23 = sphi 0, %s27
    %p24 = scmp.ge.s32.totalorder %s23, 10
    %s30 = sphi 0, %s42
    %s31 = sphi 0, %s38
    %s32 = sphi 0, %s30
    %s33 = sphi 0, %s31
    %s34 = sphi 0, %s32
    %s35 = sphi 0, %s33
    %s45 = sphi 0, %s47
    %s48 = sphi 0, %s45
    %s49 = sphi 0, %s48
    %s65 = sphi 0, %s49
    %s69 = sphi 0, %s69
    %s71 = sphi 0, %s69
    %s72 = sphi 0, %s71
    %s86 = sphi 0, %s72
    %s90 = sphi 0, %s90
    %s92 = sphi 0, %s90
    %s93 = sphi 0, %s92
    %s107 = sphi 0, %s93
    %s113 = sphi 0, %s115
    %s116 = sphi 0, %s113
    %s117 = sphi 0, %s116
    %s133 = sphi 0, %s117
  $region4: #{tpu_custom_call.1} parent=0 // loop_header_branch
    %26 = sbr.rel (%p24) target = $region8
  $region5: #{tpu_custom_call.1} parent=0 // loop_body
    %s28 = ssub.s32 %s23, 1
    %s29 = ssub.s32 %s23, 2
    %s36 = sadd.s32 1, %s31
    %p37 = scmp.ge.s32.totalorder %s36, 4
    %s38 = scalar_select %p37, 0, %s36
    %s39 = sadd.s32 1, %s30
    %s40 = scalar_select %p37, %s39, %s30
    %p41 = scmp.ge.s32.totalorder %s40, 2
    %s42 = scalar_select %p41, 0, %s40
    %s43 = ssub.s32 %s30, %s42
    %p44 = scmp.eq.s32.totalorder %s43, 0
    %s46 = sadd.s32 %s45, 1
    %s47 = scalar_select %p44, %s45, %s46
    %p50 = pneg %p44
    %p51 = scmp.eq.s32.totalorder %s23, 7
    %p52 = por %p50, %p51
    %p53 = scmp.ne.s32.totalorder %s45, %s48
    %p54 = scmp.eq.s32.totalorder %s23, 0
    %p55 = por %p53, %p54
    %p56 = scmp.ne.s32.totalorder %s45, %s48
    %p57 = scmp.eq.s32.totalorder %s28, 7
    %p58 = por %p56, %p57
    %p59 = scmp.ne.s32.totalorder %s48, %s49
    %p60 = scmp.eq.s32.totalorder %s28, 0
    %p61 = por %p59, %p60
    %p62 = scmp.ne.s32.totalorder %s48, %s49
    %p63 = scmp.eq.s32.totalorder %s29, 7
    %p64 = por %p62, %p63
    %p66 = scmp.ne.s32.totalorder %s49, %s65
    %p67 = scmp.eq.s32.totalorder %s29, 0
    %p68 = por %p66, %p67
    %s70 = sadd.s32 %s69, 1
    %p73 = scmp.eq.s32.totalorder %s23, 7
    %p74 = scmp.ne.s32.totalorder %s69, %s71
    %p75 = scmp.eq.s32.totalorder %s23, 0
    %p76 = por %p74, %p75
    %p77 = scmp.ne.s32.totalorder %s69, %s71
    %p78 = scmp.eq.s32.totalorder %s28, 7
    %p79 = por %p77, %p78
    %p80 = scmp.ne.s32.totalorder %s71, %s72
    %p81 = scmp.eq.s32.totalorder %s28, 0
    %p82 = por %p80, %p81
    %p83 = scmp.ne.s32.totalorder %s71, %s72
    %p84 = scmp.eq.s32.totalorder %s29, 7
    %p85 = por %p83, %p84
    %p87 = scmp.ne.s32.totalorder %s72, %s86
    %p88 = scmp.eq.s32.totalorder %s29, 0
    %p89 = por %p87, %p88
    %s91 = sadd.s32 %s90, 1
    %p94 = scmp.eq.s32.totalorder %s23, 7
    %p95 = scmp.ne.s32.totalorder %s90, %s92
    %p96 = scmp.eq.s32.totalorder %s23, 0
    %p97 = por %p95, %p96
    %p98 = scmp.ne.s32.totalorder %s90, %s92
    %p99 = scmp.eq.s32.totalorder %s28, 7
    %p100 = por %p98, %p99
    %p101 = scmp.ne.s32.totalorder %s92, %s93
    %p102 = scmp.eq.s32.totalorder %s28, 0
    %p103 = por %p101, %p102
    %p104 = scmp.ne.s32.totalorder %s92, %s93
    %p105 = scmp.eq.s32.totalorder %s29, 7
    %p106 = por %p104, %p105
    %p108 = scmp.ne.s32.totalorder %s93, %s107
    %p109 = scmp.eq.s32.totalorder %s29, 0
    %p110 = por %p108, %p109
    %s111 = ssub.s32 %s30, %s42
    %p112 = scmp.eq.s32.totalorder %s111, 0
    %s114 = sadd.s32 %s113, 1
    %s115 = scalar_select %p112, %s113, %s114
    %p118 = pneg %p112
    %p119 = scmp.eq.s32.totalorder %s23, 7
    %p120 = por %p118, %p119
    %p121 = scmp.ne.s32.totalorder %s113, %s116
    %p122 = scmp.eq.s32.totalorder %s23, 0
    %p123 = por %p121, %p122
    %p124 = scmp.ne.s32.totalorder %s113, %s116
    %p125 = scmp.eq.s32.totalorder %s28, 7
    %p126 = por %p124, %p125
    %p127 = scmp.ne.s32.totalorder %s116, %s117
    %p128 = scmp.eq.s32.totalorder %s28, 0
    %p129 = por %p127, %p128
    %p130 = scmp.ne.s32.totalorder %s116, %s117
    %p131 = scmp.eq.s32.totalorder %s29, 7
    %p132 = por %p130, %p131
    %p134 = scmp.ne.s32.totalorder %s117, %s133
    %p135 = scmp.eq.s32.totalorder %s29, 0
    %p136 = por %p134, %p135
    %p137 = scmp.le.s32.totalorder 1, %s23
    %p138 = scmp.lt.s32.totalorder %s23, 9
    %p139 = pnand %p137, %p138
    %p140 = pneg %p139
    // Predicated region
    $region9: #{tpu_custom_call.1} parent=5 // pred_check
      _
    $region10: #{tpu_custom_call.1} parent=5 // pred_check_branch
      %142 = sbr.rel (%p139) target = $region12
    $region11: #{tpu_custom_call.1} parent=5 // pred_region
      %s143 = ssub.s32 %s23, 1
      // Predicated region
      $region13: #{tpu_custom_call.1} parent=11 // pred_check
        %p144 = pneg %p82
      $region14: #{tpu_custom_call.1} parent=11 // pred_check_branch
        %146 = sbr.rel (%p144) target = $region16
      $region15: #{tpu_custom_call.1} parent=11 // pred_region
        _
      $region16: #{tpu_custom_call.1} parent=11 // pred_fallthru
        _
      // Predicated region
      $region17: #{tpu_custom_call.1} parent=11 // pred_check
        %p147 = pneg %p103
      $region18: #{tpu_custom_call.1} parent=11 // pred_check_branch
        %149 = sbr.rel (%p147) target = $region20
      $region19: #{tpu_custom_call.1} parent=11 // pred_region
        _
      $region20: #{tpu_custom_call.1} parent=11 // pred_fallthru
        _
    $region12: #{tpu_custom_call.1} parent=5 // pred_fallthru
      _
    %p150 = scmp.lt.s32.totalorder %s23, 8
    // Predicated region
    $region21: #{tpu_custom_call.1} parent=5 // pred_check
      %p151 = pneg %p150
    $region22: #{tpu_custom_call.1} parent=5 // pred_check_branch
      %153 = sbr.rel (%p151) target = $region24
    $region23: #{tpu_custom_call.1} parent=5 // pred_region
      // Predicated region
      $region25: #{tpu_custom_call.1} parent=23 // pred_check
        %p154 = pneg %p55
      $region26: #{tpu_custom_call.1} parent=23 // pred_check_branch
        %156 = sbr.rel (%p154) target = $region28
      $region27: #{tpu_custom_call.1} parent=23 // pred_region
        %p157 = scmp.lt.s32.totalorder %s30, 1
        %s158 = scalar_select %p157, %s30, 1
        %s159 = smul.addr %s158, 4
        %s160 = smul.addr %s159, 8
        %s161 = scalar_lea.vmem %s2, %s160
      $region28: #{tpu_custom_call.1} parent=23 // pred_fallthru
        _
    $region24: #{tpu_custom_call.1} parent=5 // pred_fallthru
      _
    %p162 = scmp.le.s32.totalorder 1, %s23
    %p163 = scmp.lt.s32.totalorder %s23, 9
    %p164 = pnand %p162, %p163
    %p165 = pneg %p164
    // Predicated region
    $region29: #{tpu_custom_call.1} parent=5 // pred_check
      _
    $region30: #{tpu_custom_call.1} parent=5 // pred_check_branch
      %167 = sbr.rel (%p164) target = $region32
    $region31: #{tpu_custom_call.1} parent=5 // pred_region
      %s168 = ssub.s32 %s23, 1
      %p169 = scmp.lt.s32.totalorder %s32, 1
      %s170 = scalar_select %p169, %s32, 1
      %s171 = smul.addr %s170, 4
      %s172 = smul.addr %s171, 8
      %s173 = scalar_lea.vmem %s2, %s172
      %p174 = pneg %p61
      %p175 = pneg %p58
      %p176 = pneg %p82
      %p177 = pneg %p79
      %p178 = pneg %p103
      %p179 = pneg %p100
      %p180 = pneg %p129
      %p181 = pneg %p126
      %p182 = scmp.lt.s32.totalorder %s32, 1
      %s183 = scalar_select %p182, %s32, 1
      %s184 = scalar_lea.vmem %s6, %s183
      %p185 = scmp.lt.s32.totalorder %s32, 1
      %s186 = scalar_select %p185, %s32, 1
      %s187 = smul.addr %s186, 4
      %s188 = smul.addr %s187, 8
      %s189 = scalar_lea.vmem %s2, %s188
      %p190 = scmp.lt.s32.totalorder %s32, 1
      %s191 = scalar_select %p190, %s32, 1
      %s192 = scalar_lea.vmem %s6, %s191
      %p193 = scmp.lt.s32.totalorder %s33, 0
      %s194 = ssub.s32 0, %s33
      %s195 = scalar_select %p193, %s194, %s33
      %s196 = sand.u32 %s195, 1
      %s197 = ssub.s32 0, %s196
      %s198 = scalar_select %p193, %s197, %s196
      %p199 = scmp.ne.s32.totalorder %s198, 0
      %p200 = scmp.lt.s32.totalorder %s198, 0
      %p201 = pnand %p200, %p199
      %p202 = pneg %p201
      %s203 = sadd.s32 %s198, 2
      %s204 = scalar_select %p202, %s203, %s198
      %s205 = sld [smem:[#allocation8 + %s32]]
      %s206 = smul.u32 %s33, 8
      %p207 = scmp.lt.s32.totalorder %s206, %s205
      %p208 = scmp.eq.s32.totalorder %s33, 0
      %p209 = pnand %p208, %p207
      %p210 = pneg %p209
      // Predicated region
      $region33: #{tpu_custom_call.1} parent=31 // pred_check
        _
      $region34: #{tpu_custom_call.1} parent=31 // pred_check_branch
        %212 = sbr.rel (%p209) target = $region36
      $region35: #{tpu_custom_call.1} parent=31 // pred_region
        %s213 = smul.u32 %s32, 32
        %s214 = sadd.s32 %s213, %s206
        %s215 = sld [smem:[#allocation7 + %s214]]
        %p216 = scmp.gt.s32.totalorder %s215, 0
        %s217 = scalar_select %p216, %s215, 0
        %p218 = scmp.lt.s32.totalorder %s217, 63
        %s219 = scalar_select %p218, %s217, 63
        %s220 = scalar_lea.vmem %s5, %s219
        %s221 = smul.u32 %s204, 8
        %s222 = scalar_lea.vmem [#allocation2], %s221
        %s223 = scalar_lea.sflag [#allocation5], %s204
        %p225 = scmp.lt.u32.totalorder 1, 8
        %p226 = pneg %p225
        // Predicated region
        $region37: #{tpu_custom_call.1} parent=35 // pred_check
          _
        $region38: #{tpu_custom_call.1} parent=35 // pred_check_branch
          %228 = sbr.rel (%p225) target = $region40
        $region39: #{tpu_custom_call.1} parent=35 // pred_region
          %s243 = sand.u32 1, 7
          %p244 = scmp.eq.s32.totalorder %s243, 0
          %p245 = pneg %p244
          // Predicated region
          $region52: #{tpu_custom_call.1} parent=39 // pred_check
            _
          $region53: #{tpu_custom_call.1} parent=39 // pred_check_branch
            %247 = sbr.rel (%p244) target = $region55
          $region54: #{tpu_custom_call.1} parent=39 // pred_region
            %s248 = sand.u32 1, 7
            %s249 = ssub.s32 1, %s248
            %s250 = scalar_lea.vmem %s220, %s249
            %s251 = ssub.s32 1, %s248
            %s252 = scalar_lea.vmem %s222, %s251 [#allocation2]
            %s253 = sshllo.u32 0, %s248
            loop: start=0, step=1, limit=1
            $region56: #{tpu_custom_call.1} parent=54 // loop_pre_header
              _
            $region57: #{tpu_custom_call.1} parent=54 // loop_header
              %s255 = sphi 0, %s259
              %p256 = scmp.ge.s32.totalorder %s255, 1
              %s260 = sphi %s250, %s250
              %s261 = sphi %s252, %s252
            $region58: #{tpu_custom_call.1} parent=54 // loop_header_branch
              %258 = sbr.rel (%p256) target = $region62
            $region59: #{tpu_custom_call.1} parent=54 // loop_body
              %v262 = vld [vmem:[%s260] sm:%s253]
              %263 = vst [vmem:[%s261] sm:%s253] %v262
            $region60: #{tpu_custom_call.1} parent=54 // loop_footer
              %s259 = sadd.s32 1, %s255
            $region61: #{tpu_custom_call.1} parent=54 // loop_footer_branch
              %254 = sbr.rel target = $region57
            $region62: #{tpu_custom_call.1} parent=54 // loop_exit
              _
          $region55: #{tpu_custom_call.1} parent=39 // pred_fallthru
            _
        $region40: #{tpu_custom_call.1} parent=35 // pred_fallthru
          _
        // Predicated region
        $region41: #{tpu_custom_call.1} parent=35 // pred_check
          %p229 = pneg %p225
        $region42: #{tpu_custom_call.1} parent=35 // pred_check_branch
          %231 = sbr.rel (%p229) target = $region44
        $region43: #{tpu_custom_call.1} parent=35 // pred_region
          %s232 = sshllo.u32 0, 1
          loop: start=0, step=1, limit=1
          $region45: #{tpu_custom_call.1} parent=43 // loop_pre_header
            _
          $region46: #{tpu_custom_call.1} parent=43 // loop_header
            %s234 = sphi 0, %s238
            %p235 = scmp.ge.s32.totalorder %s234, 1
            %s239 = sphi %s220, %s220
            %s240 = sphi %s222, %s222
          $region47: #{tpu_custom_call.1} parent=43 // loop_header_branch
            %237 = sbr.rel (%p235) target = $region51
          $region48: #{tpu_custom_call.1} parent=43 // loop_body
            %v241 = vld [vmem:[%s239] sm:%s232]
            %242 = vst [vmem:[%s240] sm:%s232] %v241
          $region49: #{tpu_custom_call.1} parent=43 // loop_footer
            %s238 = sadd.s32 1, %s234
          $region50: #{tpu_custom_call.1} parent=43 // loop_footer_branch
            %233 = sbr.rel target = $region46
          $region51: #{tpu_custom_call.1} parent=43 // loop_exit
            _
        $region44: #{tpu_custom_call.1} parent=35 // pred_fallthru
          _
        // Predicated region
        $region63: #{tpu_custom_call.1} parent=35 // pred_check
          _
        $region64: #{tpu_custom_call.1} parent=35 // pred_check_branch
          %266 = sbr.rel (0) target = $region66
        $region65: #{tpu_custom_call.1} parent=35 // pred_region
          %267 = vsyncadd %s223, 16
        $region66: #{tpu_custom_call.1} parent=35 // pred_fallthru
          _
        %s268 = sadd.s32 %s214, 1
        %s269 = sld [smem:[#allocation7 + %s268]]
        %p270 = scmp.gt.s32.totalorder %s269, 0
        %s271 = scalar_select %p270, %s269, 0
        %p272 = scmp.lt.s32.totalorder %s271, 63
        %s273 = scalar_select %p272, %s271, 63
        %s274 = scalar_lea.vmem %s5, %s273
        %s275 = sadd.s32 1, %s221
        %s276 = scalar_lea.vmem [#allocation2], %s275
        %p278 = scmp.lt.u32.totalorder 1, 8
        %p279 = pneg %p278
        // Predicated region
        $region67: #{tpu_custom_call.1} parent=35 // pred_check
          _
        $region68: #{tpu_custom_call.1} parent=35 // pred_check_branch
          %281 = sbr.rel (%p278) target = $region70
        $region69: #{tpu_custom_call.1} parent=35 // pred_region
          %s296 = sand.u32 1, 7
          %p297 = scmp.eq.s32.totalorder %s296, 0
          %p298 = pneg %p297
          // Predicated region
          $region82: #{tpu_custom_call.1} parent=69 // pred_check
            _
          $region83: #{tpu_custom_call.1} parent=69 // pred_check_branch
            %300 = sbr.rel (%p297) target = $region85
          $region84: #{tpu_custom_call.1} parent=69 // pred_region
            %s301 = sand.u32 1, 7
            %s302 = ssub.s32 1, %s301
            %s303 = scalar_lea.vmem %s274, %s302
            %s304 = ssub.s32 1, %s301
            %s305 = scalar_lea.vmem %s276, %s304 [#allocation2]
            %s306 = sshllo.u32 0, %s301
            loop: start=0, step=1, limit=1
            $region86: #{tpu_custom_call.1} parent=84 // loop_pre_header
              _
            $region87: #{tpu_custom_call.1} parent=84 // loop_header
              %s308 = sphi 0, %s312
              %p309 = scmp.ge.s32.totalorder %s308, 1
              %s313 = sphi %s303, %s303
              %s314 = sphi %s305, %s305
            $region88: #{tpu_custom_call.1} parent=84 // loop_header_branch
              %311 = sbr.rel (%p309) target = $region92
            $region89: #{tpu_custom_call.1} parent=84 // loop_body
              %v315 = vld [vmem:[%s313] sm:%s306]
              %316 = vst [vmem:[%s314] sm:%s306] %v315
            $region90: #{tpu_custom_call.1} parent=84 // loop_footer
              %s312 = sadd.s32 1, %s308
            $region91: #{tpu_custom_call.1} parent=84 // loop_footer_branch
              %307 = sbr.rel target = $region87
            $region92: #{tpu_custom_call.1} parent=84 // loop_exit
              _
          $region85: #{tpu_custom_call.1} parent=69 // pred_fallthru
            _
        $region70: #{tpu_custom_call.1} parent=35 // pred_fallthru
          _
        // Predicated region
        $region71: #{tpu_custom_call.1} parent=35 // pred_check
          %p282 = pneg %p278
        $region72: #{tpu_custom_call.1} parent=35 // pred_check_branch
          %284 = sbr.rel (%p282) target = $region74
        $region73: #{tpu_custom_call.1} parent=35 // pred_region
          %s285 = sshllo.u32 0, 1
          loop: start=0, step=1, limit=1
          $region75: #{tpu_custom_call.1} parent=73 // loop_pre_header
            _
          $region76: #{tpu_custom_call.1} parent=73 // loop_header
            %s287 = sphi 0, %s291
            %p288 = scmp.ge.s32.totalorder %s287, 1
            %s292 = sphi %s274, %s274
            %s293 = sphi %s276, %s276
          $region77: #{tpu_custom_call.1} parent=73 // loop_header_branch
            %290 = sbr.rel (%p288) target = $region81
          $region78: #{tpu_custom_call.1} parent=73 // loop_body
            %v294 = vld [vmem:[%s292] sm:%s285]
            %295 = vst [vmem:[%s293] sm:%s285] %v294
          $region79: #{tpu_custom_call.1} parent=73 // loop_footer
            %s291 = sadd.s32 1, %s287
          $region80: #{tpu_custom_call.1} parent=73 // loop_footer_branch
            %286 = sbr.rel target = $region76
          $region81: #{tpu_custom_call.1} parent=73 // loop_exit
            _
        $region74: #{tpu_custom_call.1} parent=35 // pred_fallthru
          _
        // Predicated region
        $region93: #{tpu_custom_call.1} parent=35 // pred_check
          _
        $region94: #{tpu_custom_call.1} parent=35 // pred_check_branch
          %319 = sbr.rel (0) target = $region96
        $region95: #{tpu_custom_call.1} parent=35 // pred_region
          %320 = vsyncadd %s223, 16
        $region96: #{tpu_custom_call.1} parent=35 // pred_fallthru
          _
        %s321 = sadd.s32 %s214, 2
        %s322 = sld [smem:[#allocation7 + %s321]]
        %p323 = scmp.gt.s32.totalorder %s322, 0
        %s324 = scalar_select %p323, %s322, 0
        %p325 = scmp.lt.s32.totalorder %s324, 63
        %s326 = scalar_select %p325, %s324, 63
        %s327 = scalar_lea.vmem %s5, %s326
        %s328 = sadd.s32 2, %s221
        %s329 = scalar_lea.vmem [#allocation2], %s328
        %p331 = scmp.lt.u32.totalorder 1, 8
        %p332 = pneg %p331
        // Predicated region
        $region97: #{tpu_custom_call.1} parent=35 // pred_check
          _
        $region98: #{tpu_custom_call.1} parent=35 // pred_check_branch
          %334 = sbr.rel (%p331) target = $region100
        $region99: #{tpu_custom_call.1} parent=35 // pred_region
          %s349 = sand.u32 1, 7
          %p350 = scmp.eq.s32.totalorder %s349, 0
          %p351 = pneg %p350
          // Predicated region
          $region112: #{tpu_custom_call.1} parent=99 // pred_check
            _
          $region113: #{tpu_custom_call.1} parent=99 // pred_check_branch
            %353 = sbr.rel (%p350) target = $region115
          $region114: #{tpu_custom_call.1} parent=99 // pred_region
            %s354 = sand.u32 1, 7
            %s355 = ssub.s32 1, %s354
            %s356 = scalar_lea.vmem %s327, %s355
            %s357 = ssub.s32 1, %s354
            %s358 = scalar_lea.vmem %s329, %s357 [#allocation2]
            %s359 = sshllo.u32 0, %s354
            loop: start=0, step=1, limit=1
            $region116: #{tpu_custom_call.1} parent=114 // loop_pre_header
              _
            $region117: #{tpu_custom_call.1} parent=114 // loop_header
              %s361 = sphi 0, %s365
              %p362 = scmp.ge.s32.totalorder %s361, 1
              %s366 = sphi %s356, %s356
              %s367 = sphi %s358, %s358
            $region118: #{tpu_custom_call.1} parent=114 // loop_header_branch
              %364 = sbr.rel (%p362) target = $region122
            $region119: #{tpu_custom_call.1} parent=114 // loop_body
              %v368 = vld [vmem:[%s366] sm:%s359]
              %369 = vst [vmem:[%s367] sm:%s359] %v368
            $region120: #{tpu_custom_call.1} parent=114 // loop_footer
              %s365 = sadd.s32 1, %s361
            $region121: #{tpu_custom_call.1} parent=114 // loop_footer_branch
              %360 = sbr.rel target = $region117
            $region122: #{tpu_custom_call.1} parent=114 // loop_exit
              _
          $region115: #{tpu_custom_call.1} parent=99 // pred_fallthru
            _
        $region100: #{tpu_custom_call.1} parent=35 // pred_fallthru
          _
        // Predicated region
        $region101: #{tpu_custom_call.1} parent=35 // pred_check
          %p335 = pneg %p331
        $region102: #{tpu_custom_call.1} parent=35 // pred_check_branch
          %337 = sbr.rel (%p335) target = $region104
        $region103: #{tpu_custom_call.1} parent=35 // pred_region
          %s338 = sshllo.u32 0, 1
          loop: start=0, step=1, limit=1
          $region105: #{tpu_custom_call.1} parent=103 // loop_pre_header
            _
          $region106: #{tpu_custom_call.1} parent=103 // loop_header
            %s340 = sphi 0, %s344
            %p341 = scmp.ge.s32.totalorder %s340, 1
            %s345 = sphi %s327, %s327
            %s346 = sphi %s329, %s329
          $region107: #{tpu_custom_call.1} parent=103 // loop_header_branch
            %343 = sbr.rel (%p341) target = $region111
          $region108: #{tpu_custom_call.1} parent=103 // loop_body
            %v347 = vld [vmem:[%s345] sm:%s338]
            %348 = vst [vmem:[%s346] sm:%s338] %v347
          $region109: #{tpu_custom_call.1} parent=103 // loop_footer
            %s344 = sadd.s32 1, %s340
          $region110: #{tpu_custom_call.1} parent=103 // loop_footer_branch
            %339 = sbr.rel target = $region106
          $region111: #{tpu_custom_call.1} parent=103 // loop_exit
            _
        $region104: #{tpu_custom_call.1} parent=35 // pred_fallthru
          _
        // Predicated region
        $region123: #{tpu_custom_call.1} parent=35 // pred_check
          _
        $region124: #{tpu_custom_call.1} parent=35 // pred_check_branch
          %372 = sbr.rel (0) target = $region126
        $region125: #{tpu_custom_call.1} parent=35 // pred_region
          %373 = vsyncadd %s223, 16
        $region126: #{tpu_custom_call.1} parent=35 // pred_fallthru
          _
        %s374 = sadd.s32 %s214, 3
        %s375 = sld [smem:[#allocation7 + %s374]]
        %p376 = scmp.gt.s32.totalorder %s375, 0
        %s377 = scalar_select %p376, %s375, 0
        %p378 = scmp.lt.s32.totalorder %s377, 63
        %s379 = scalar_select %p378, %s377, 63
        %s380 = scalar_lea.vmem %s5, %s379
        %s381 = sadd.s32 3, %s221
        %s382 = scalar_lea.vmem [#allocation2], %s381
        %p384 = scmp.lt.u32.totalorder 1, 8
        %p385 = pneg %p384
        // Predicated region
        $region127: #{tpu_custom_call.1} parent=35 // pred_check
          _
        $region128: #{tpu_custom_call.1} parent=35 // pred_check_branch
          %387 = sbr.rel (%p384) target = $region130
        $region129: #{tpu_custom_call.1} parent=35 // pred_region
          %s402 = sand.u32 1, 7
          %p403 = scmp.eq.s32.totalorder %s402, 0
          %p404 = pneg %p403
          // Predicated region
          $region142: #{tpu_custom_call.1} parent=129 // pred_check
            _
          $region143: #{tpu_custom_call.1} parent=129 // pred_check_branch
            %406 = sbr.rel (%p403) target = $region145
          $region144: #{tpu_custom_call.1} parent=129 // pred_region
            %s407 = sand.u32 1, 7
            %s408 = ssub.s32 1, %s407
            %s409 = scalar_lea.vmem %s380, %s408
            %s410 = ssub.s32 1, %s407
            %s411 = scalar_lea.vmem %s382, %s410 [#allocation2]
            %s412 = sshllo.u32 0, %s407
            loop: start=0, step=1, limit=1
            $region146: #{tpu_custom_call.1} parent=144 // loop_pre_header
              _
            $region147: #{tpu_custom_call.1} parent=144 // loop_header
              %s414 = sphi 0, %s418
              %p415 = scmp.ge.s32.totalorder %s414, 1
              %s419 = sphi %s409, %s409
              %s420 = sphi %s411, %s411
            $region148: #{tpu_custom_call.1} parent=144 // loop_header_branch
              %417 = sbr.rel (%p415) target = $region152
            $region149: #{tpu_custom_call.1} parent=144 // loop_body
              %v421 = vld [vmem:[%s419] sm:%s412]
              %422 = vst [vmem:[%s420] sm:%s412] %v421
            $region150: #{tpu_custom_call.1} parent=144 // loop_footer
              %s418 = sadd.s32 1, %s414
            $region151: #{tpu_custom_call.1} parent=144 // loop_footer_branch
              %413 = sbr.rel target = $region147
            $region152: #{tpu_custom_call.1} parent=144 // loop_exit
              _
          $region145: #{tpu_custom_call.1} parent=129 // pred_fallthru
            _
        $region130: #{tpu_custom_call.1} parent=35 // pred_fallthru
          _
        // Predicated region
        $region131: #{tpu_custom_call.1} parent=35 // pred_check
          %p388 = pneg %p384
        $region132: #{tpu_custom_call.1} parent=35 // pred_check_branch
          %390 = sbr.rel (%p388) target = $region134
        $region133: #{tpu_custom_call.1} parent=35 // pred_region
          %s391 = sshllo.u32 0, 1
          loop: start=0, step=1, limit=1
          $region135: #{tpu_custom_call.1} parent=133 // loop_pre_header
            _
          $region136: #{tpu_custom_call.1} parent=133 // loop_header
            %s393 = sphi 0, %s397
            %p394 = scmp.ge.s32.totalorder %s393, 1
            %s398 = sphi %s380, %s380
            %s399 = sphi %s382, %s382
          $region137: #{tpu_custom_call.1} parent=133 // loop_header_branch
            %396 = sbr.rel (%p394) target = $region141
          $region138: #{tpu_custom_call.1} parent=133 // loop_body
            %v400 = vld [vmem:[%s398] sm:%s391]
            %401 = vst [vmem:[%s399] sm:%s391] %v400
          $region139: #{tpu_custom_call.1} parent=133 // loop_footer
            %s397 = sadd.s32 1, %s393
          $region140: #{tpu_custom_call.1} parent=133 // loop_footer_branch
            %392 = sbr.rel target = $region136
          $region141: #{tpu_custom_call.1} parent=133 // loop_exit
            _
        $region134: #{tpu_custom_call.1} parent=35 // pred_fallthru
          _
        // Predicated region
        $region153: #{tpu_custom_call.1} parent=35 // pred_check
          _
        $region154: #{tpu_custom_call.1} parent=35 // pred_check_branch
          %425 = sbr.rel (0) target = $region156
        $region155: #{tpu_custom_call.1} parent=35 // pred_region
          %426 = vsyncadd %s223, 16
        $region156: #{tpu_custom_call.1} parent=35 // pred_fallthru
          _
        %s427 = sadd.s32 %s214, 4
        %s428 = sld [smem:[#allocation7 + %s427]]
        %p429 = scmp.gt.s32.totalorder %s428, 0
        %s430 = scalar_select %p429, %s428, 0
        %p431 = scmp.lt.s32.totalorder %s430, 63
        %s432 = scalar_select %p431, %s430, 63
        %s433 = scalar_lea.vmem %s5, %s432
        %s434 = sadd.s32 4, %s221
        %s435 = scalar_lea.vmem [#allocation2], %s434
        %p437 = scmp.lt.u32.totalorder 1, 8
        %p438 = pneg %p437
        // Predicated region
        $region157: #{tpu_custom_call.1} parent=35 // pred_check
          _
        $region158: #{tpu_custom_call.1} parent=35 // pred_check_branch
          %440 = sbr.rel (%p437) target = $region160
        $region159: #{tpu_custom_call.1} parent=35 // pred_region
          %s455 = sand.u32 1, 7
          %p456 = scmp.eq.s32.totalorder %s455, 0
          %p457 = pneg %p456
          // Predicated region
          $region172: #{tpu_custom_call.1} parent=159 // pred_check
            _
          $region173: #{tpu_custom_call.1} parent=159 // pred_check_branch
            %459 = sbr.rel (%p456) target = $region175
          $region174: #{tpu_custom_call.1} parent=159 // pred_region
            %s460 = sand.u32 1, 7
            %s461 = ssub.s32 1, %s460
            %s462 = scalar_lea.vmem %s433, %s461
            %s463 = ssub.s32 1, %s460
            %s464 = scalar_lea.vmem %s435, %s463 [#allocation2]
            %s465 = sshllo.u32 0, %s460
            loop: start=0, step=1, limit=1
            $region176: #{tpu_custom_call.1} parent=174 // loop_pre_header
              _
            $region177: #{tpu_custom_call.1} parent=174 // loop_header
              %s467 = sphi 0, %s471
              %p468 = scmp.ge.s32.totalorder %s467, 1
              %s472 = sphi %s462, %s462
              %s473 = sphi %s464, %s464
            $region178: #{tpu_custom_call.1} parent=174 // loop_header_branch
              %470 = sbr.rel (%p468) target = $region182
            $region179: #{tpu_custom_call.1} parent=174 // loop_body
              %v474 = vld [vmem:[%s472] sm:%s465]
              %475 = vst [vmem:[%s473] sm:%s465] %v474
            $region180: #{tpu_custom_call.1} parent=174 // loop_footer
              %s471 = sadd.s32 1, %s467
            $region181: #{tpu_custom_call.1} parent=174 // loop_footer_branch
              %466 = sbr.rel target = $region177
            $region182: #{tpu_custom_call.1} parent=174 // loop_exit
              _
          $region175: #{tpu_custom_call.1} parent=159 // pred_fallthru
            _
        $region160: #{tpu_custom_call.1} parent=35 // pred_fallthru
          _
        // Predicated region
        $region161: #{tpu_custom_call.1} parent=35 // pred_check
          %p441 = pneg %p437
        $region162: #{tpu_custom_call.1} parent=35 // pred_check_branch
          %443 = sbr.rel (%p441) target = $region164
        $region163: #{tpu_custom_call.1} parent=35 // pred_region
          %s444 = sshllo.u32 0, 1
          loop: start=0, step=1, limit=1
          $region165: #{tpu_custom_call.1} parent=163 // loop_pre_header
            _
          $region166: #{tpu_custom_call.1} parent=163 // loop_header
            %s446 = sphi 0, %s450
            %p447 = scmp.ge.s32.totalorder %s446, 1
            %s451 = sphi %s433, %s433
            %s452 = sphi %s435, %s435
          $region167: #{tpu_custom_call.1} parent=163 // loop_header_branch
            %449 = sbr.rel (%p447) target = $region171
          $region168: #{tpu_custom_call.1} parent=163 // loop_body
            %v453 = vld [vmem:[%s451] sm:%s444]
            %454 = vst [vmem:[%s452] sm:%s444] %v453
          $region169: #{tpu_custom_call.1} parent=163 // loop_footer
            %s450 = sadd.s32 1, %s446
          $region170: #{tpu_custom_call.1} parent=163 // loop_footer_branch
            %445 = sbr.rel target = $region166
          $region171: #{tpu_custom_call.1} parent=163 // loop_exit
            _
        $region164: #{tpu_custom_call.1} parent=35 // pred_fallthru
          _
        // Predicated region
        $region183: #{tpu_custom_call.1} parent=35 // pred_check
          _
        $region184: #{tpu_custom_call.1} parent=35 // pred_check_branch
          %478 = sbr.rel (0) target = $region186
        $region185: #{tpu_custom_call.1} parent=35 // pred_region
          %479 = vsyncadd %s223, 16
        $region186: #{tpu_custom_call.1} parent=35 // pred_fallthru
          _
        %s480 = sadd.s32 %s214, 5
        %s481 = sld [smem:[#allocation7 + %s480]]
        %p482 = scmp.gt.s32.totalorder %s481, 0
        %s483 = scalar_select %p482, %s481, 0
        %p484 = scmp.lt.s32.totalorder %s483, 63
        %s485 = scalar_select %p484, %s483, 63
        %s486 = scalar_lea.vmem %s5, %s485
        %s487 = sadd.s32 5, %s221
        %s488 = scalar_lea.vmem [#allocation2], %s487
        %p490 = scmp.lt.u32.totalorder 1, 8
        %p491 = pneg %p490
        // Predicated region
        $region187: #{tpu_custom_call.1} parent=35 // pred_check
          _
        $region188: #{tpu_custom_call.1} parent=35 // pred_check_branch
          %493 = sbr.rel (%p490) target = $region190
        $region189: #{tpu_custom_call.1} parent=35 // pred_region
          %s508 = sand.u32 1, 7
          %p509 = scmp.eq.s32.totalorder %s508, 0
          %p510 = pneg %p509
          // Predicated region
          $region202: #{tpu_custom_call.1} parent=189 // pred_check
            _
          $region203: #{tpu_custom_call.1} parent=189 // pred_check_branch
            %512 = sbr.rel (%p509) target = $region205
          $region204: #{tpu_custom_call.1} parent=189 // pred_region
            %s513 = sand.u32 1, 7
            %s514 = ssub.s32 1, %s513
            %s515 = scalar_lea.vmem %s486, %s514
            %s516 = ssub.s32 1, %s513
            %s517 = scalar_lea.vmem %s488, %s516 [#allocation2]
            %s518 = sshllo.u32 0, %s513
            loop: start=0, step=1, limit=1
            $region206: #{tpu_custom_call.1} parent=204 // loop_pre_header
              _
            $region207: #{tpu_custom_call.1} parent=204 // loop_header
              %s520 = sphi 0, %s524
              %p521 = scmp.ge.s32.totalorder %s520, 1
              %s525 = sphi %s515, %s515
              %s526 = sphi %s517, %s517
            $region208: #{tpu_custom_call.1} parent=204 // loop_header_branch
              %523 = sbr.rel (%p521) target = $region212
            $region209: #{tpu_custom_call.1} parent=204 // loop_body
              %v527 = vld [vmem:[%s525] sm:%s518]
              %528 = vst [vmem:[%s526] sm:%s518] %v527
            $region210: #{tpu_custom_call.1} parent=204 // loop_footer
              %s524 = sadd.s32 1, %s520
            $region211: #{tpu_custom_call.1} parent=204 // loop_footer_branch
              %519 = sbr.rel target = $region207
            $region212: #{tpu_custom_call.1} parent=204 // loop_exit
              _
          $region205: #{tpu_custom_call.1} parent=189 // pred_fallthru
            _
        $region190: #{tpu_custom_call.1} parent=35 // pred_fallthru
          _
        // Predicated region
        $region191: #{tpu_custom_call.1} parent=35 // pred_check
          %p494 = pneg %p490
        $region192: #{tpu_custom_call.1} parent=35 // pred_check_branch
          %496 = sbr.rel (%p494) target = $region194
        $region193: #{tpu_custom_call.1} parent=35 // pred_region
          %s497 = sshllo.u32 0, 1
          loop: start=0, step=1, limit=1
          $region195: #{tpu_custom_call.1} parent=193 // loop_pre_header
            _
          $region196: #{tpu_custom_call.1} parent=193 // loop_header
            %s499 = sphi 0, %s503
            %p500 = scmp.ge.s32.totalorder %s499, 1
            %s504 = sphi %s486, %s486
            %s505 = sphi %s488, %s488
          $region197: #{tpu_custom_call.1} parent=193 // loop_header_branch
            %502 = sbr.rel (%p500) target = $region201
          $region198: #{tpu_custom_call.1} parent=193 // loop_body
            %v506 = vld [vmem:[%s504] sm:%s497]
            %507 = vst [vmem:[%s505] sm:%s497] %v506
          $region199: #{tpu_custom_call.1} parent=193 // loop_footer
            %s503 = sadd.s32 1, %s499
          $region200: #{tpu_custom_call.1} parent=193 // loop_footer_branch
            %498 = sbr.rel target = $region196
          $region201: #{tpu_custom_call.1} parent=193 // loop_exit
            _
        $region194: #{tpu_custom_call.1} parent=35 // pred_fallthru
          _
        // Predicated region
        $region213: #{tpu_custom_call.1} parent=35 // pred_check
          _
        $region214: #{tpu_custom_call.1} parent=35 // pred_check_branch
          %531 = sbr.rel (0) target = $region216
        $region215: #{tpu_custom_call.1} parent=35 // pred_region
          %532 = vsyncadd %s223, 16
        $region216: #{tpu_custom_call.1} parent=35 // pred_fallthru
          _
        %s533 = sadd.s32 %s214, 6
        %s534 = sld [smem:[#allocation7 + %s533]]
        %p535 = scmp.gt.s32.totalorder %s534, 0
        %s536 = scalar_select %p535, %s534, 0
        %p537 = scmp.lt.s32.totalorder %s536, 63
        %s538 = scalar_select %p537, %s536, 63
        %s539 = scalar_lea.vmem %s5, %s538
        %s540 = sadd.s32 6, %s221
        %s541 = scalar_lea.vmem [#allocation2], %s540
        %p543 = scmp.lt.u32.totalorder 1, 8
        %p544 = pneg %p543
        // Predicated region
        $region217: #{tpu_custom_call.1} parent=35 // pred_check
          _
        $region218: #{tpu_custom_call.1} parent=35 // pred_check_branch
          %546 = sbr.rel (%p543) target = $region220
        $region219: #{tpu_custom_call.1} parent=35 // pred_region
          %s561 = sand.u32 1, 7
          %p562 = scmp.eq.s32.totalorder %s561, 0
          %p563 = pneg %p562
          // Predicated region
          $region232: #{tpu_custom_call.1} parent=219 // pred_check
            _
          $region233: #{tpu_custom_call.1} parent=219 // pred_check_branch
            %565 = sbr.rel (%p562) target = $region235
          $region234: #{tpu_custom_call.1} parent=219 // pred_region
            %s566 = sand.u32 1, 7
            %s567 = ssub.s32 1, %s566
            %s568 = scalar_lea.vmem %s539, %s567
            %s569 = ssub.s32 1, %s566
            %s570 = scalar_lea.vmem %s541, %s569 [#allocation2]
            %s571 = sshllo.u32 0, %s566
            loop: start=0, step=1, limit=1
            $region236: #{tpu_custom_call.1} parent=234 // loop_pre_header
              _
            $region237: #{tpu_custom_call.1} parent=234 // loop_header
              %s573 = sphi 0, %s577
              %p574 = scmp.ge.s32.totalorder %s573, 1
              %s578 = sphi %s568, %s568
              %s579 = sphi %s570, %s570
            $region238: #{tpu_custom_call.1} parent=234 // loop_header_branch
              %576 = sbr.rel (%p574) target = $region242
            $region239: #{tpu_custom_call.1} parent=234 // loop_body
              %v580 = vld [vmem:[%s578] sm:%s571]
              %581 = vst [vmem:[%s579] sm:%s571] %v580
            $region240: #{tpu_custom_call.1} parent=234 // loop_footer
              %s577 = sadd.s32 1, %s573
            $region241: #{tpu_custom_call.1} parent=234 // loop_footer_branch
              %572 = sbr.rel target = $region237
            $region242: #{tpu_custom_call.1} parent=234 // loop_exit
              _
          $region235: #{tpu_custom_call.1} parent=219 // pred_fallthru
            _
        $region220: #{tpu_custom_call.1} parent=35 // pred_fallthru
          _
        // Predicated region
        $region221: #{tpu_custom_call.1} parent=35 // pred_check
          %p547 = pneg %p543
        $region222: #{tpu_custom_call.1} parent=35 // pred_check_branch
          %549 = sbr.rel (%p547) target = $region224
        $region223: #{tpu_custom_call.1} parent=35 // pred_region
          %s550 = sshllo.u32 0, 1
          loop: start=0, step=1, limit=1
          $region225: #{tpu_custom_call.1} parent=223 // loop_pre_header
            _
          $region226: #{tpu_custom_call.1} parent=223 // loop_header
            %s552 = sphi 0, %s556
            %p553 = scmp.ge.s32.totalorder %s552, 1
            %s557 = sphi %s539, %s539
            %s558 = sphi %s541, %s541
          $region227: #{tpu_custom_call.1} parent=223 // loop_header_branch
            %555 = sbr.rel (%p553) target = $region231
          $region228: #{tpu_custom_call.1} parent=223 // loop_body
            %v559 = vld [vmem:[%s557] sm:%s550]
            %560 = vst [vmem:[%s558] sm:%s550] %v559
          $region229: #{tpu_custom_call.1} parent=223 // loop_footer
            %s556 = sadd.s32 1, %s552
          $region230: #{tpu_custom_call.1} parent=223 // loop_footer_branch
            %551 = sbr.rel target = $region226
          $region231: #{tpu_custom_call.1} parent=223 // loop_exit
            _
        $region224: #{tpu_custom_call.1} parent=35 // pred_fallthru
          _
        // Predicated region
        $region243: #{tpu_custom_call.1} parent=35 // pred_check
          _
        $region244: #{tpu_custom_call.1} parent=35 // pred_check_branch
          %584 = sbr.rel (0) target = $region246
        $region245: #{tpu_custom_call.1} parent=35 // pred_region
          %585 = vsyncadd %s223, 16
        $region246: #{tpu_custom_call.1} parent=35 // pred_fallthru
          _
        %s586 = sadd.s32 %s214, 7
        %s587 = sld [smem:[#allocation7 + %s586]]
        %p588 = scmp.gt.s32.totalorder %s587, 0
        %s589 = scalar_select %p588, %s587, 0
        %p590 = scmp.lt.s32.totalorder %s589, 63
        %s591 = scalar_select %p590, %s589, 63
        %s592 = scalar_lea.vmem %s5, %s591
        %s593 = sadd.s32 7, %s221
        %s594 = scalar_lea.vmem [#allocation2], %s593
        %p596 = scmp.lt.u32.totalorder 1, 8
        %p597 = pneg %p596
        // Predicated region
        $region247: #{tpu_custom_call.1} parent=35 // pred_check
          _
        $region248: #{tpu_custom_call.1} parent=35 // pred_check_branch
          %599 = sbr.rel (%p596) target = $region250
        $region249: #{tpu_custom_call.1} parent=35 // pred_region
          %s614 = sand.u32 1, 7
          %p615 = scmp.eq.s32.totalorder %s614, 0
          %p616 = pneg %p615
          // Predicated region
          $region262: #{tpu_custom_call.1} parent=249 // pred_check
            _
          $region263: #{tpu_custom_call.1} parent=249 // pred_check_branch
            %618 = sbr.rel (%p615) target = $region265
          $region264: #{tpu_custom_call.1} parent=249 // pred_region
            %s619 = sand.u32 1, 7
            %s620 = ssub.s32 1, %s619
            %s621 = scalar_lea.vmem %s592, %s620
            %s622 = ssub.s32 1, %s619
            %s623 = scalar_lea.vmem %s594, %s622 [#allocation2]
            %s624 = sshllo.u32 0, %s619
            loop: start=0, step=1, limit=1
            $region266: #{tpu_custom_call.1} parent=264 // loop_pre_header
              _
            $region267: #{tpu_custom_call.1} parent=264 // loop_header
              %s626 = sphi 0, %s630
              %p627 = scmp.ge.s32.totalorder %s626, 1
              %s631 = sphi %s621, %s621
              %s632 = sphi %s623, %s623
            $region268: #{tpu_custom_call.1} parent=264 // loop_header_branch
              %629 = sbr.rel (%p627) target = $region272
            $region269: #{tpu_custom_call.1} parent=264 // loop_body
              %v633 = vld [vmem:[%s631] sm:%s624]
              %634 = vst [vmem:[%s632] sm:%s624] %v633
            $region270: #{tpu_custom_call.1} parent=264 // loop_footer
              %s630 = sadd.s32 1, %s626
            $region271: #{tpu_custom_call.1} parent=264 // loop_footer_branch
              %625 = sbr.rel target = $region267
            $region272: #{tpu_custom_call.1} parent=264 // loop_exit
              _
          $region265: #{tpu_custom_call.1} parent=249 // pred_fallthru
            _
        $region250: #{tpu_custom_call.1} parent=35 // pred_fallthru
          _
        // Predicated region
        $region251: #{tpu_custom_call.1} parent=35 // pred_check
          %p600 = pneg %p596
        $region252: #{tpu_custom_call.1} parent=35 // pred_check_branch
          %602 = sbr.rel (%p600) target = $region254
        $region253: #{tpu_custom_call.1} parent=35 // pred_region
          %s603 = sshllo.u32 0, 1
          loop: start=0, step=1, limit=1
          $region255: #{tpu_custom_call.1} parent=253 // loop_pre_header
            _
          $region256: #{tpu_custom_call.1} parent=253 // loop_header
            %s605 = sphi 0, %s609
            %p606 = scmp.ge.s32.totalorder %s605, 1
            %s610 = sphi %s592, %s592
            %s611 = sphi %s594, %s594
          $region257: #{tpu_custom_call.1} parent=253 // loop_header_branch
            %608 = sbr.rel (%p606) target = $region261
          $region258: #{tpu_custom_call.1} parent=253 // loop_body
            %v612 = vld [vmem:[%s610] sm:%s603]
            %613 = vst [vmem:[%s611] sm:%s603] %v612
          $region259: #{tpu_custom_call.1} parent=253 // loop_footer
            %s609 = sadd.s32 1, %s605
          $region260: #{tpu_custom_call.1} parent=253 // loop_footer_branch
            %604 = sbr.rel target = $region256
          $region261: #{tpu_custom_call.1} parent=253 // loop_exit
            _
        $region254: #{tpu_custom_call.1} parent=35 // pred_fallthru
          _
        // Predicated region
        $region273: #{tpu_custom_call.1} parent=35 // pred_check
          _
        $region274: #{tpu_custom_call.1} parent=35 // pred_check_branch
          %637 = sbr.rel (0) target = $region276
        $region275: #{tpu_custom_call.1} parent=35 // pred_region
          %638 = vsyncadd %s223, 16
        $region276: #{tpu_custom_call.1} parent=35 // pred_fallthru
          _
      $region36: #{tpu_custom_call.1} parent=31 // pred_fallthru
        _
      %s639 = sadd.s32 %s33, 1
      %p640 = scmp.lt.s32.totalorder %s639, 4
      %s641 = smul.u32 %s639, 8
      %p642 = scmp.lt.s32.totalorder %s641, %s205
      %p643 = pnand %p640, %p642
      %p644 = pneg %p643
      // Predicated region
      $region277: #{tpu_custom_call.1} parent=31 // pred_check
        _
      $region278: #{tpu_custom_call.1} parent=31 // pred_check_branch
        %646 = sbr.rel (%p643) target = $region280
      $region279: #{tpu_custom_call.1} parent=31 // pred_region
        %s647 = ssub.s32 1, %s204
        %s648 = smul.u32 %s32, 32
        %s649 = sadd.s32 %s648, %s641
        %s650 = sld [smem:[#allocation7 + %s649]]
        %p651 = scmp.gt.s32.totalorder %s650, 0
        %s652 = scalar_select %p651, %s650, 0
        %p653 = scmp.lt.s32.totalorder %s652, 63
        %s654 = scalar_select %p653, %s652, 63
        %s655 = scalar_lea.vmem %s5, %s654
        %s656 = smul.u32 %s647, 8
        %s657 = scalar_lea.vmem [#allocation2], %s656
        %s658 = scalar_lea.sflag [#allocation5], %s647
        %p660 = scmp.lt.u32.totalorder 1, 8
        %p661 = pneg %p660
        // Predicated region
        $region281: #{tpu_custom_call.1} parent=279 // pred_check
          _
        $region282: #{tpu_custom_call.1} parent=279 // pred_check_branch
          %663 = sbr.rel (%p660) target = $region284
        $region283: #{tpu_custom_call.1} parent=279 // pred_region
          %s678 = sand.u32 1, 7
          %p679 = scmp.eq.s32.totalorder %s678, 0
          %p680 = pneg %p679
          // Predicated region
          $region296: #{tpu_custom_call.1} parent=283 // pred_check
            _
          $region297: #{tpu_custom_call.1} parent=283 // pred_check_branch
            %682 = sbr.rel (%p679) target = $region299
          $region298: #{tpu_custom_call.1} parent=283 // pred_region
            %s683 = sand.u32 1, 7
            %s684 = ssub.s32 1, %s683
            %s685 = scalar_lea.vmem %s655, %s684
            %s686 = ssub.s32 1, %s683
            %s687 = scalar_lea.vmem %s657, %s686 [#allocation2]
            %s688 = sshllo.u32 0, %s683
            loop: start=0, step=1, limit=1
            $region300: #{tpu_custom_call.1} parent=298 // loop_pre_header
              _
            $region301: #{tpu_custom_call.1} parent=298 // loop_header
              %s690 = sphi 0, %s694
              %p691 = scmp.ge.s32.totalorder %s690, 1
              %s695 = sphi %s685, %s685
              %s696 = sphi %s687, %s687
            $region302: #{tpu_custom_call.1} parent=298 // loop_header_branch
              %693 = sbr.rel (%p691) target = $region306
            $region303: #{tpu_custom_call.1} parent=298 // loop_body
              %v697 = vld [vmem:[%s695] sm:%s688]
              %698 = vst [vmem:[%s696] sm:%s688] %v697
            $region304: #{tpu_custom_call.1} parent=298 // loop_footer
              %s694 = sadd.s32 1, %s690
            $region305: #{tpu_custom_call.1} parent=298 // loop_footer_branch
              %689 = sbr.rel target = $region301
            $region306: #{tpu_custom_call.1} parent=298 // loop_exit
              _
          $region299: #{tpu_custom_call.1} parent=283 // pred_fallthru
            _
        $region284: #{tpu_custom_call.1} parent=279 // pred_fallthru
          _
        // Predicated region
        $region285: #{tpu_custom_call.1} parent=279 // pred_check
          %p664 = pneg %p660
        $region286: #{tpu_custom_call.1} parent=279 // pred_check_branch
          %666 = sbr.rel (%p664) target = $region288
        $region287: #{tpu_custom_call.1} parent=279 // pred_region
          %s667 = sshllo.u32 0, 1
          loop: start=0, step=1, limit=1
          $region289: #{tpu_custom_call.1} parent=287 // loop_pre_header
            _
          $region290: #{tpu_custom_call.1} parent=287 // loop_header
            %s669 = sphi 0, %s673
            %p670 = scmp.ge.s32.totalorder %s669, 1
            %s674 = sphi %s655, %s655
            %s675 = sphi %s657, %s657
          $region291: #{tpu_custom_call.1} parent=287 // loop_header_branch
            %672 = sbr.rel (%p670) target = $region295
          $region292: #{tpu_custom_call.1} parent=287 // loop_body
            %v676 = vld [vmem:[%s674] sm:%s667]
            %677 = vst [vmem:[%s675] sm:%s667] %v676
          $region293: #{tpu_custom_call.1} parent=287 // loop_footer
            %s673 = sadd.s32 1, %s669
          $region294: #{tpu_custom_call.1} parent=287 // loop_footer_branch
            %668 = sbr.rel target = $region290
          $region295: #{tpu_custom_call.1} parent=287 // loop_exit
            _
        $region288: #{tpu_custom_call.1} parent=279 // pred_fallthru
          _
        // Predicated region
        $region307: #{tpu_custom_call.1} parent=279 // pred_check
          _
        $region308: #{tpu_custom_call.1} parent=279 // pred_check_branch
          %701 = sbr.rel (0) target = $region310
        $region309: #{tpu_custom_call.1} parent=279 // pred_region
          %702 = vsyncadd %s658, 16
        $region310: #{tpu_custom_call.1} parent=279 // pred_fallthru
          _
        %s703 = sadd.s32 %s649, 1
        %s704 = sld [smem:[#allocation7 + %s703]]
        %p705 = scmp.gt.s32.totalorder %s704, 0
        %s706 = scalar_select %p705, %s704, 0
        %p707 = scmp.lt.s32.totalorder %s706, 63
        %s708 = scalar_select %p707, %s706, 63
        %s709 = scalar_lea.vmem %s5, %s708
        %s710 = sadd.s32 1, %s656
        %s711 = scalar_lea.vmem [#allocation2], %s710
        %p713 = scmp.lt.u32.totalorder 1, 8
        %p714 = pneg %p713
        // Predicated region
        $region311: #{tpu_custom_call.1} parent=279 // pred_check
          _
        $region312: #{tpu_custom_call.1} parent=279 // pred_check_branch
          %716 = sbr.rel (%p713) target = $region314
        $region313: #{tpu_custom_call.1} parent=279 // pred_region
          %s731 = sand.u32 1, 7
          %p732 = scmp.eq.s32.totalorder %s731, 0
          %p733 = pneg %p732
          // Predicated region
          $region326: #{tpu_custom_call.1} parent=313 // pred_check
            _
          $region327: #{tpu_custom_call.1} parent=313 // pred_check_branch
            %735 = sbr.rel (%p732) target = $region329
          $region328: #{tpu_custom_call.1} parent=313 // pred_region
            %s736 = sand.u32 1, 7
            %s737 = ssub.s32 1, %s736
            %s738 = scalar_lea.vmem %s709, %s737
            %s739 = ssub.s32 1, %s736
            %s740 = scalar_lea.vmem %s711, %s739 [#allocation2]
            %s741 = sshllo.u32 0, %s736
            loop: start=0, step=1, limit=1
            $region330: #{tpu_custom_call.1} parent=328 // loop_pre_header
              _
            $region331: #{tpu_custom_call.1} parent=328 // loop_header
              %s743 = sphi 0, %s747
              %p744 = scmp.ge.s32.totalorder %s743, 1
              %s748 = sphi %s738, %s738
              %s749 = sphi %s740, %s740
            $region332: #{tpu_custom_call.1} parent=328 // loop_header_branch
              %746 = sbr.rel (%p744) target = $region336
            $region333: #{tpu_custom_call.1} parent=328 // loop_body
              %v750 = vld [vmem:[%s748] sm:%s741]
              %751 = vst [vmem:[%s749] sm:%s741] %v750
            $region334: #{tpu_custom_call.1} parent=328 // loop_footer
              %s747 = sadd.s32 1, %s743
            $region335: #{tpu_custom_call.1} parent=328 // loop_footer_branch
              %742 = sbr.rel target = $region331
            $region336: #{tpu_custom_call.1} parent=328 // loop_exit
              _
          $region329: #{tpu_custom_call.1} parent=313 // pred_fallthru
            _
        $region314: #{tpu_custom_call.1} parent=279 // pred_fallthru
          _
        // Predicated region
        $region315: #{tpu_custom_call.1} parent=279 // pred_check
          %p717 = pneg %p713
        $region316: #{tpu_custom_call.1} parent=279 // pred_check_branch
          %719 = sbr.rel (%p717) target = $region318
        $region317: #{tpu_custom_call.1} parent=279 // pred_region
          %s720 = sshllo.u32 0, 1
          loop: start=0, step=1, limit=1
          $region319: #{tpu_custom_call.1} parent=317 // loop_pre_header
            _
          $region320: #{tpu_custom_call.1} parent=317 // loop_header
            %s722 = sphi 0, %s726
            %p723 = scmp.ge.s32.totalorder %s722, 1
            %s727 = sphi %s709, %s709
            %s728 = sphi %s711, %s711
          $region321: #{tpu_custom_call.1} parent=317 // loop_header_branch
            %725 = sbr.rel (%p723) target = $region325
          $region322: #{tpu_custom_call.1} parent=317 // loop_body
            %v729 = vld [vmem:[%s727] sm:%s720]
            %730 = vst [vmem:[%s728] sm:%s720] %v729
          $region323: #{tpu_custom_call.1} parent=317 // loop_footer
            %s726 = sadd.s32 1, %s722
          $region324: #{tpu_custom_call.1} parent=317 // loop_footer_branch
            %721 = sbr.rel target = $region320
          $region325: #{tpu_custom_call.1} parent=317 // loop_exit
            _
        $region318: #{tpu_custom_call.1} parent=279 // pred_fallthru
          _
        // Predicated region
        $region337: #{tpu_custom_call.1} parent=279 // pred_check
          _
        $region338: #{tpu_custom_call.1} parent=279 // pred_check_branch
          %754 = sbr.rel (0) target = $region340
        $region339: #{tpu_custom_call.1} parent=279 // pred_region
          %755 = vsyncadd %s658, 16
        $region340: #{tpu_custom_call.1} parent=279 // pred_fallthru
          _
        %s756 = sadd.s32 %s649, 2
        %s757 = sld [smem:[#allocation7 + %s756]]
        %p758 = scmp.gt.s32.totalorder %s757, 0
        %s759 = scalar_select %p758, %s757, 0
        %p760 = scmp.lt.s32.totalorder %s759, 63
        %s761 = scalar_select %p760, %s759, 63
        %s762 = scalar_lea.vmem %s5, %s761
        %s763 = sadd.s32 2, %s656
        %s764 = scalar_lea.vmem [#allocation2], %s763
        %p766 = scmp.lt.u32.totalorder 1, 8
        %p767 = pneg %p766
        // Predicated region
        $region341: #{tpu_custom_call.1} parent=279 // pred_check
          _
        $region342: #{tpu_custom_call.1} parent=279 // pred_check_branch
          %769 = sbr.rel (%p766) target = $region344
        $region343: #{tpu_custom_call.1} parent=279 // pred_region
          %s784 = sand.u32 1, 7
          %p785 = scmp.eq.s32.totalorder %s784, 0
          %p786 = pneg %p785
          // Predicated region
          $region356: #{tpu_custom_call.1} parent=343 // pred_check
            _
          $region357: #{tpu_custom_call.1} parent=343 // pred_check_branch
            %788 = sbr.rel (%p785) target = $region359
          $region358: #{tpu_custom_call.1} parent=343 // pred_region
            %s789 = sand.u32 1, 7
            %s790 = ssub.s32 1, %s789
            %s791 = scalar_lea.vmem %s762, %s790
            %s792 = ssub.s32 1, %s789
            %s793 = scalar_lea.vmem %s764, %s792 [#allocation2]
            %s794 = sshllo.u32 0, %s789
            loop: start=0, step=1, limit=1
            $region360: #{tpu_custom_call.1} parent=358 // loop_pre_header
              _
            $region361: #{tpu_custom_call.1} parent=358 // loop_header
              %s796 = sphi 0, %s800
              %p797 = scmp.ge.s32.totalorder %s796, 1
              %s801 = sphi %s791, %s791
              %s802 = sphi %s793, %s793
            $region362: #{tpu_custom_call.1} parent=358 // loop_header_branch
              %799 = sbr.rel (%p797) target = $region366
            $region363: #{tpu_custom_call.1} parent=358 // loop_body
              %v803 = vld [vmem:[%s801] sm:%s794]
              %804 = vst [vmem:[%s802] sm:%s794] %v803
            $region364: #{tpu_custom_call.1} parent=358 // loop_footer
              %s800 = sadd.s32 1, %s796
            $region365: #{tpu_custom_call.1} parent=358 // loop_footer_branch
              %795 = sbr.rel target = $region361
            $region366: #{tpu_custom_call.1} parent=358 // loop_exit
              _
          $region359: #{tpu_custom_call.1} parent=343 // pred_fallthru
            _
        $region344: #{tpu_custom_call.1} parent=279 // pred_fallthru
          _
        // Predicated region
        $region345: #{tpu_custom_call.1} parent=279 // pred_check
          %p770 = pneg %p766
        $region346: #{tpu_custom_call.1} parent=279 // pred_check_branch
          %772 = sbr.rel (%p770) target = $region348
        $region347: #{tpu_custom_call.1} parent=279 // pred_region
          %s773 = sshllo.u32 0, 1
          loop: start=0, step=1, limit=1
          $region349: #{tpu_custom_call.1} parent=347 // loop_pre_header
            _
          $region350: #{tpu_custom_call.1} parent=347 // loop_header
            %s775 = sphi 0, %s779
            %p776 = scmp.ge.s32.totalorder %s775, 1
            %s780 = sphi %s762, %s762
            %s781 = sphi %s764, %s764
          $region351: #{tpu_custom_call.1} parent=347 // loop_header_branch
            %778 = sbr.rel (%p776) target = $region355
          $region352: #{tpu_custom_call.1} parent=347 // loop_body
            %v782 = vld [vmem:[%s780] sm:%s773]
            %783 = vst [vmem:[%s781] sm:%s773] %v782
          $region353: #{tpu_custom_call.1} parent=347 // loop_footer
            %s779 = sadd.s32 1, %s775
          $region354: #{tpu_custom_call.1} parent=347 // loop_footer_branch
            %774 = sbr.rel target = $region350
          $region355: #{tpu_custom_call.1} parent=347 // loop_exit
            _
        $region348: #{tpu_custom_call.1} parent=279 // pred_fallthru
          _
        // Predicated region
        $region367: #{tpu_custom_call.1} parent=279 // pred_check
          _
        $region368: #{tpu_custom_call.1} parent=279 // pred_check_branch
          %807 = sbr.rel (0) target = $region370
        $region369: #{tpu_custom_call.1} parent=279 // pred_region
          %808 = vsyncadd %s658, 16
        $region370: #{tpu_custom_call.1} parent=279 // pred_fallthru
          _
        %s809 = sadd.s32 %s649, 3
        %s810 = sld [smem:[#allocation7 + %s809]]
        %p811 = scmp.gt.s32.totalorder %s810, 0
        %s812 = scalar_select %p811, %s810, 0
        %p813 = scmp.lt.s32.totalorder %s812, 63
        %s814 = scalar_select %p813, %s812, 63
        %s815 = scalar_lea.vmem %s5, %s814
        %s816 = sadd.s32 3, %s656
        %s817 = scalar_lea.vmem [#allocation2], %s816
        %p819 = scmp.lt.u32.totalorder 1, 8
        %p820 = pneg %p819
        // Predicated region
        $region371: #{tpu_custom_call.1} parent=279 // pred_check
          _
        $region372: #{tpu_custom_call.1} parent=279 // pred_check_branch
          %822 = sbr.rel (%p819) target = $region374
        $region373: #{tpu_custom_call.1} parent=279 // pred_region
          %s837 = sand.u32 1, 7
          %p838 = scmp.eq.s32.totalorder %s837, 0
          %p839 = pneg %p838
          // Predicated region
          $region386: #{tpu_custom_call.1} parent=373 // pred_check
            _
          $region387: #{tpu_custom_call.1} parent=373 // pred_check_branch
            %841 = sbr.rel (%p838) target = $region389
          $region388: #{tpu_custom_call.1} parent=373 // pred_region
            %s842 = sand.u32 1, 7
            %s843 = ssub.s32 1, %s842
            %s844 = scalar_lea.vmem %s815, %s843
            %s845 = ssub.s32 1, %s842
            %s846 = scalar_lea.vmem %s817, %s845 [#allocation2]
            %s847 = sshllo.u32 0, %s842
            loop: start=0, step=1, limit=1
            $region390: #{tpu_custom_call.1} parent=388 // loop_pre_header
              _
            $region391: #{tpu_custom_call.1} parent=388 // loop_header
              %s849 = sphi 0, %s853
              %p850 = scmp.ge.s32.totalorder %s849, 1
              %s854 = sphi %s844, %s844
              %s855 = sphi %s846, %s846
            $region392: #{tpu_custom_call.1} parent=388 // loop_header_branch
              %852 = sbr.rel (%p850) target = $region396
            $region393: #{tpu_custom_call.1} parent=388 // loop_body
              %v856 = vld [vmem:[%s854] sm:%s847]
              %857 = vst [vmem:[%s855] sm:%s847] %v856
            $region394: #{tpu_custom_call.1} parent=388 // loop_footer
              %s853 = sadd.s32 1, %s849
            $region395: #{tpu_custom_call.1} parent=388 // loop_footer_branch
              %848 = sbr.rel target = $region391
            $region396: #{tpu_custom_call.1} parent=388 // loop_exit
              _
          $region389: #{tpu_custom_call.1} parent=373 // pred_fallthru
            _
        $region374: #{tpu_custom_call.1} parent=279 // pred_fallthru
          _
        // Predicated region
        $region375: #{tpu_custom_call.1} parent=279 // pred_check
          %p823 = pneg %p819
        $region376: #{tpu_custom_call.1} parent=279 // pred_check_branch
          %825 = sbr.rel (%p823) target = $region378
        $region377: #{tpu_custom_call.1} parent=279 // pred_region
          %s826 = sshllo.u32 0, 1
          loop: start=0, step=1, limit=1
          $region379: #{tpu_custom_call.1} parent=377 // loop_pre_header
            _
          $region380: #{tpu_custom_call.1} parent=377 // loop_header
            %s828 = sphi 0, %s832
            %p829 = scmp.ge.s32.totalorder %s828, 1
            %s833 = sphi %s815, %s815
            %s834 = sphi %s817, %s817
          $region381: #{tpu_custom_call.1} parent=377 // loop_header_branch
            %831 = sbr.rel (%p829) target = $region385
          $region382: #{tpu_custom_call.1} parent=377 // loop_body
            %v835 = vld [vmem:[%s833] sm:%s826]
            %836 = vst [vmem:[%s834] sm:%s826] %v835
          $region383: #{tpu_custom_call.1} parent=377 // loop_footer
            %s832 = sadd.s32 1, %s828
          $region384: #{tpu_custom_call.1} parent=377 // loop_footer_branch
            %827 = sbr.rel target = $region380
          $region385: #{tpu_custom_call.1} parent=377 // loop_exit
            _
        $region378: #{tpu_custom_call.1} parent=279 // pred_fallthru
          _
        // Predicated region
        $region397: #{tpu_custom_call.1} parent=279 // pred_check
          _
        $region398: #{tpu_custom_call.1} parent=279 // pred_check_branch
          %860 = sbr.rel (0) target = $region400
        $region399: #{tpu_custom_call.1} parent=279 // pred_region
          %861 = vsyncadd %s658, 16
        $region400: #{tpu_custom_call.1} parent=279 // pred_fallthru
          _
        %s862 = sadd.s32 %s649, 4
        %s863 = sld [smem:[#allocation7 + %s862]]
        %p864 = scmp.gt.s32.totalorder %s863, 0
        %s865 = scalar_select %p864, %s863, 0
        %p866 = scmp.lt.s32.totalorder %s865, 63
        %s867 = scalar_select %p866, %s865, 63
        %s868 = scalar_lea.vmem %s5, %s867
        %s869 = sadd.s32 4, %s656
        %s870 = scalar_lea.vmem [#allocation2], %s869
        %p872 = scmp.lt.u32.totalorder 1, 8
        %p873 = pneg %p872
        // Predicated region
        $region401: #{tpu_custom_call.1} parent=279 // pred_check
          _
        $region402: #{tpu_custom_call.1} parent=279 // pred_check_branch
          %875 = sbr.rel (%p872) target = $region404
        $region403: #{tpu_custom_call.1} parent=279 // pred_region
          %s890 = sand.u32 1, 7
          %p891 = scmp.eq.s32.totalorder %s890, 0
          %p892 = pneg %p891
          // Predicated region
          $region416: #{tpu_custom_call.1} parent=403 // pred_check
            _
          $region417: #{tpu_custom_call.1} parent=403 // pred_check_branch
            %894 = sbr.rel (%p891) target = $region419
          $region418: #{tpu_custom_call.1} parent=403 // pred_region
            %s895 = sand.u32 1, 7
            %s896 = ssub.s32 1, %s895
            %s897 = scalar_lea.vmem %s868, %s896
            %s898 = ssub.s32 1, %s895
            %s899 = scalar_lea.vmem %s870, %s898 [#allocation2]
            %s900 = sshllo.u32 0, %s895
            loop: start=0, step=1, limit=1
            $region420: #{tpu_custom_call.1} parent=418 // loop_pre_header
              _
            $region421: #{tpu_custom_call.1} parent=418 // loop_header
              %s902 = sphi 0, %s906
              %p903 = scmp.ge.s32.totalorder %s902, 1
              %s907 = sphi %s897, %s897
              %s908 = sphi %s899, %s899
            $region422: #{tpu_custom_call.1} parent=418 // loop_header_branch
              %905 = sbr.rel (%p903) target = $region426
            $region423: #{tpu_custom_call.1} parent=418 // loop_body
              %v909 = vld [vmem:[%s907] sm:%s900]
              %910 = vst [vmem:[%s908] sm:%s900] %v909
            $region424: #{tpu_custom_call.1} parent=418 // loop_footer
              %s906 = sadd.s32 1, %s902
            $region425: #{tpu_custom_call.1} parent=418 // loop_footer_branch
              %901 = sbr.rel target = $region421
            $region426: #{tpu_custom_call.1} parent=418 // loop_exit
              _
          $region419: #{tpu_custom_call.1} parent=403 // pred_fallthru
            _
        $region404: #{tpu_custom_call.1} parent=279 // pred_fallthru
          _
        // Predicated region
        $region405: #{tpu_custom_call.1} parent=279 // pred_check
          %p876 = pneg %p872
        $region406: #{tpu_custom_call.1} parent=279 // pred_check_branch
          %878 = sbr.rel (%p876) target = $region408
        $region407: #{tpu_custom_call.1} parent=279 // pred_region
          %s879 = sshllo.u32 0, 1
          loop: start=0, step=1, limit=1
          $region409: #{tpu_custom_call.1} parent=407 // loop_pre_header
            _
          $region410: #{tpu_custom_call.1} parent=407 // loop_header
            %s881 = sphi 0, %s885
            %p882 = scmp.ge.s32.totalorder %s881, 1
            %s886 = sphi %s868, %s868
            %s887 = sphi %s870, %s870
          $region411: #{tpu_custom_call.1} parent=407 // loop_header_branch
            %884 = sbr.rel (%p882) target = $region415
          $region412: #{tpu_custom_call.1} parent=407 // loop_body
            %v888 = vld [vmem:[%s886] sm:%s879]
            %889 = vst [vmem:[%s887] sm:%s879] %v888
          $region413: #{tpu_custom_call.1} parent=407 // loop_footer
            %s885 = sadd.s32 1, %s881
          $region414: #{tpu_custom_call.1} parent=407 // loop_footer_branch
            %880 = sbr.rel target = $region410
          $region415: #{tpu_custom_call.1} parent=407 // loop_exit
            _
        $region408: #{tpu_custom_call.1} parent=279 // pred_fallthru
          _
        // Predicated region
        $region427: #{tpu_custom_call.1} parent=279 // pred_check
          _
        $region428: #{tpu_custom_call.1} parent=279 // pred_check_branch
          %913 = sbr.rel (0) target = $region430
        $region429: #{tpu_custom_call.1} parent=279 // pred_region
          %914 = vsyncadd %s658, 16
        $region430: #{tpu_custom_call.1} parent=279 // pred_fallthru
          _
        %s915 = sadd.s32 %s649, 5
        %s916 = sld [smem:[#allocation7 + %s915]]
        %p917 = scmp.gt.s32.totalorder %s916, 0
        %s918 = scalar_select %p917, %s916, 0
        %p919 = scmp.lt.s32.totalorder %s918, 63
        %s920 = scalar_select %p919, %s918, 63
        %s921 = scalar_lea.vmem %s5, %s920
        %s922 = sadd.s32 5, %s656
        %s923 = scalar_lea.vmem [#allocation2], %s922
        %p925 = scmp.lt.u32.totalorder 1, 8
        %p926 = pneg %p925
        // Predicated region
        $region431: #{tpu_custom_call.1} parent=279 // pred_check
          _
        $region432: #{tpu_custom_call.1} parent=279 // pred_check_branch
          %928 = sbr.rel (%p925) target = $region434
        $region433: #{tpu_custom_call.1} parent=279 // pred_region
          %s943 = sand.u32 1, 7
          %p944 = scmp.eq.s32.totalorder %s943, 0
          %p945 = pneg %p944
          // Predicated region
          $region446: #{tpu_custom_call.1} parent=433 // pred_check
            _
          $region447: #{tpu_custom_call.1} parent=433 // pred_check_branch
            %947 = sbr.rel (%p944) target = $region449
          $region448: #{tpu_custom_call.1} parent=433 // pred_region
            %s948 = sand.u32 1, 7
            %s949 = ssub.s32 1, %s948
            %s950 = scalar_lea.vmem %s921, %s949
            %s951 = ssub.s32 1, %s948
            %s952 = scalar_lea.vmem %s923, %s951 [#allocation2]
            %s953 = sshllo.u32 0, %s948
            loop: start=0, step=1, limit=1
            $region450: #{tpu_custom_call.1} parent=448 // loop_pre_header
              _
            $region451: #{tpu_custom_call.1} parent=448 // loop_header
              %s955 = sphi 0, %s959
              %p956 = scmp.ge.s32.totalorder %s955, 1
              %s960 = sphi %s950, %s950
              %s961 = sphi %s952, %s952
            $region452: #{tpu_custom_call.1} parent=448 // loop_header_branch
              %958 = sbr.rel (%p956) target = $region456
            $region453: #{tpu_custom_call.1} parent=448 // loop_body
              %v962 = vld [vmem:[%s960] sm:%s953]
              %963 = vst [vmem:[%s961] sm:%s953] %v962
            $region454: #{tpu_custom_call.1} parent=448 // loop_footer
              %s959 = sadd.s32 1, %s955
            $region455: #{tpu_custom_call.1} parent=448 // loop_footer_branch
              %954 = sbr.rel target = $region451
            $region456: #{tpu_custom_call.1} parent=448 // loop_exit
              _
          $region449: #{tpu_custom_call.1} parent=433 // pred_fallthru
            _
        $region434: #{tpu_custom_call.1} parent=279 // pred_fallthru
          _
        // Predicated region
        $region435: #{tpu_custom_call.1} parent=279 // pred_check
          %p929 = pneg %p925
        $region436: #{tpu_custom_call.1} parent=279 // pred_check_branch
          %931 = sbr.rel (%p929) target = $region438
        $region437: #{tpu_custom_call.1} parent=279 // pred_region
          %s932 = sshllo.u32 0, 1
          loop: start=0, step=1, limit=1
          $region439: #{tpu_custom_call.1} parent=437 // loop_pre_header
            _
          $region440: #{tpu_custom_call.1} parent=437 // loop_header
            %s934 = sphi 0, %s938
            %p935 = scmp.ge.s32.totalorder %s934, 1
            %s939 = sphi %s921, %s921
            %s940 = sphi %s923, %s923
          $region441: #{tpu_custom_call.1} parent=437 // loop_header_branch
            %937 = sbr.rel (%p935) target = $region445
          $region442: #{tpu_custom_call.1} parent=437 // loop_body
            %v941 = vld [vmem:[%s939] sm:%s932]
            %942 = vst [vmem:[%s940] sm:%s932] %v941
          $region443: #{tpu_custom_call.1} parent=437 // loop_footer
            %s938 = sadd.s32 1, %s934
          $region444: #{tpu_custom_call.1} parent=437 // loop_footer_branch
            %933 = sbr.rel target = $region440
          $region445: #{tpu_custom_call.1} parent=437 // loop_exit
            _
        $region438: #{tpu_custom_call.1} parent=279 // pred_fallthru
          _
        // Predicated region
        $region457: #{tpu_custom_call.1} parent=279 // pred_check
          _
        $region458: #{tpu_custom_call.1} parent=279 // pred_check_branch
          %966 = sbr.rel (0) target = $region460
        $region459: #{tpu_custom_call.1} parent=279 // pred_region
          %967 = vsyncadd %s658, 16
        $region460: #{tpu_custom_call.1} parent=279 // pred_fallthru
          _
        %s968 = sadd.s32 %s649, 6
        %s969 = sld [smem:[#allocation7 + %s968]]
        %p970 = scmp.gt.s32.totalorder %s969, 0
        %s971 = scalar_select %p970, %s969, 0
        %p972 = scmp.lt.s32.totalorder %s971, 63
        %s973 = scalar_select %p972, %s971, 63
        %s974 = scalar_lea.vmem %s5, %s973
        %s975 = sadd.s32 6, %s656
        %s976 = scalar_lea.vmem [#allocation2], %s975
        %p978 = scmp.lt.u32.totalorder 1, 8
        %p979 = pneg %p978
        // Predicated region
        $region461: #{tpu_custom_call.1} parent=279 // pred_check
          _
        $region462: #{tpu_custom_call.1} parent=279 // pred_check_branch
          %981 = sbr.rel (%p978) target = $region464
        $region463: #{tpu_custom_call.1} parent=279 // pred_region
          %s996 = sand.u32 1, 7
          %p997 = scmp.eq.s32.totalorder %s996, 0
          %p998 = pneg %p997
          // Predicated region
          $region476: #{tpu_custom_call.1} parent=463 // pred_check
            _
          $region477: #{tpu_custom_call.1} parent=463 // pred_check_branch
            %1000 = sbr.rel (%p997) target = $region479
          $region478: #{tpu_custom_call.1} parent=463 // pred_region
            %s1001 = sand.u32 1, 7
            %s1002 = ssub.s32 1, %s1001
            %s1003 = scalar_lea.vmem %s974, %s1002
            %s1004 = ssub.s32 1, %s1001
            %s1005 = scalar_lea.vmem %s976, %s1004 [#allocation2]
            %s1006 = sshllo.u32 0, %s1001
            loop: start=0, step=1, limit=1
            $region480: #{tpu_custom_call.1} parent=478 // loop_pre_header
              _
            $region481: #{tpu_custom_call.1} parent=478 // loop_header
              %s1008 = sphi 0, %s1012
              %p1009 = scmp.ge.s32.totalorder %s1008, 1
              %s1013 = sphi %s1003, %s1003
              %s1014 = sphi %s1005, %s1005
            $region482: #{tpu_custom_call.1} parent=478 // loop_header_branch
              %1011 = sbr.rel (%p1009) target = $region486
            $region483: #{tpu_custom_call.1} parent=478 // loop_body
              %v1015 = vld [vmem:[%s1013] sm:%s1006]
              %1016 = vst [vmem:[%s1014] sm:%s1006] %v1015
            $region484: #{tpu_custom_call.1} parent=478 // loop_footer
              %s1012 = sadd.s32 1, %s1008
            $region485: #{tpu_custom_call.1} parent=478 // loop_footer_branch
              %1007 = sbr.rel target = $region481
            $region486: #{tpu_custom_call.1} parent=478 // loop_exit
              _
          $region479: #{tpu_custom_call.1} parent=463 // pred_fallthru
            _
        $region464: #{tpu_custom_call.1} parent=279 // pred_fallthru
          _
        // Predicated region
        $region465: #{tpu_custom_call.1} parent=279 // pred_check
          %p982 = pneg %p978
        $region466: #{tpu_custom_call.1} parent=279 // pred_check_branch
          %984 = sbr.rel (%p982) target = $region468
        $region467: #{tpu_custom_call.1} parent=279 // pred_region
          %s985 = sshllo.u32 0, 1
          loop: start=0, step=1, limit=1
          $region469: #{tpu_custom_call.1} parent=467 // loop_pre_header
            _
          $region470: #{tpu_custom_call.1} parent=467 // loop_header
            %s987 = sphi 0, %s991
            %p988 = scmp.ge.s32.totalorder %s987, 1
            %s992 = sphi %s974, %s974
            %s993 = sphi %s976, %s976
          $region471: #{tpu_custom_call.1} parent=467 // loop_header_branch
            %990 = sbr.rel (%p988) target = $region475
          $region472: #{tpu_custom_call.1} parent=467 // loop_body
            %v994 = vld [vmem:[%s992] sm:%s985]
            %995 = vst [vmem:[%s993] sm:%s985] %v994
          $region473: #{tpu_custom_call.1} parent=467 // loop_footer
            %s991 = sadd.s32 1, %s987
          $region474: #{tpu_custom_call.1} parent=467 // loop_footer_branch
            %986 = sbr.rel target = $region470
          $region475: #{tpu_custom_call.1} parent=467 // loop_exit
            _
        $region468: #{tpu_custom_call.1} parent=279 // pred_fallthru
          _
        // Predicated region
        $region487: #{tpu_custom_call.1} parent=279 // pred_check
          _
        $region488: #{tpu_custom_call.1} parent=279 // pred_check_branch
          %1019 = sbr.rel (0) target = $region490
        $region489: #{tpu_custom_call.1} parent=279 // pred_region
          %1020 = vsyncadd %s658, 16
        $region490: #{tpu_custom_call.1} parent=279 // pred_fallthru
          _
        %s1021 = sadd.s32 %s649, 7
        %s1022 = sld [smem:[#allocation7 + %s1021]]
        %p1023 = scmp.gt.s32.totalorder %s1022, 0
        %s1024 = scalar_select %p1023, %s1022, 0
        %p1025 = scmp.lt.s32.totalorder %s1024, 63
        %s1026 = scalar_select %p1025, %s1024, 63
        %s1027 = scalar_lea.vmem %s5, %s1026
        %s1028 = sadd.s32 7, %s656
        %s1029 = scalar_lea.vmem [#allocation2], %s1028
        %p1031 = scmp.lt.u32.totalorder 1, 8
        %p1032 = pneg %p1031
        // Predicated region
        $region491: #{tpu_custom_call.1} parent=279 // pred_check
          _
        $region492: #{tpu_custom_call.1} parent=279 // pred_check_branch
          %1034 = sbr.rel (%p1031) target = $region494
        $region493: #{tpu_custom_call.1} parent=279 // pred_region
          %s1049 = sand.u32 1, 7
          %p1050 = scmp.eq.s32.totalorder %s1049, 0
          %p1051 = pneg %p1050
          // Predicated region
          $region506: #{tpu_custom_call.1} parent=493 // pred_check
            _
          $region507: #{tpu_custom_call.1} parent=493 // pred_check_branch
            %1053 = sbr.rel (%p1050) target = $region509
          $region508: #{tpu_custom_call.1} parent=493 // pred_region
            %s1054 = sand.u32 1, 7
            %s1055 = ssub.s32 1, %s1054
            %s1056 = scalar_lea.vmem %s1027, %s1055
            %s1057 = ssub.s32 1, %s1054
            %s1058 = scalar_lea.vmem %s1029, %s1057 [#allocation2]
            %s1059 = sshllo.u32 0, %s1054
            loop: start=0, step=1, limit=1
            $region510: #{tpu_custom_call.1} parent=508 // loop_pre_header
              _
            $region511: #{tpu_custom_call.1} parent=508 // loop_header
              %s1061 = sphi 0, %s1065
              %p1062 = scmp.ge.s32.totalorder %s1061, 1
              %s1066 = sphi %s1056, %s1056
              %s1067 = sphi %s1058, %s1058
            $region512: #{tpu_custom_call.1} parent=508 // loop_header_branch
              %1064 = sbr.rel (%p1062) target = $region516
            $region513: #{tpu_custom_call.1} parent=508 // loop_body
              %v1068 = vld [vmem:[%s1066] sm:%s1059]
              %1069 = vst [vmem:[%s1067] sm:%s1059] %v1068
            $region514: #{tpu_custom_call.1} parent=508 // loop_footer
              %s1065 = sadd.s32 1, %s1061
            $region515: #{tpu_custom_call.1} parent=508 // loop_footer_branch
              %1060 = sbr.rel target = $region511
            $region516: #{tpu_custom_call.1} parent=508 // loop_exit
              _
          $region509: #{tpu_custom_call.1} parent=493 // pred_fallthru
            _
        $region494: #{tpu_custom_call.1} parent=279 // pred_fallthru
          _
        // Predicated region
        $region495: #{tpu_custom_call.1} parent=279 // pred_check
          %p1035 = pneg %p1031
        $region496: #{tpu_custom_call.1} parent=279 // pred_check_branch
          %1037 = sbr.rel (%p1035) target = $region498
        $region497: #{tpu_custom_call.1} parent=279 // pred_region
          %s1038 = sshllo.u32 0, 1
          loop: start=0, step=1, limit=1
          $region499: #{tpu_custom_call.1} parent=497 // loop_pre_header
            _
          $region500: #{tpu_custom_call.1} parent=497 // loop_header
            %s1040 = sphi 0, %s1044
            %p1041 = scmp.ge.s32.totalorder %s1040, 1
            %s1045 = sphi %s1027, %s1027
            %s1046 = sphi %s1029, %s1029
          $region501: #{tpu_custom_call.1} parent=497 // loop_header_branch
            %1043 = sbr.rel (%p1041) target = $region505
          $region502: #{tpu_custom_call.1} parent=497 // loop_body
            %v1047 = vld [vmem:[%s1045] sm:%s1038]
            %1048 = vst [vmem:[%s1046] sm:%s1038] %v1047
          $region503: #{tpu_custom_call.1} parent=497 // loop_footer
            %s1044 = sadd.s32 1, %s1040
          $region504: #{tpu_custom_call.1} parent=497 // loop_footer_branch
            %1039 = sbr.rel target = $region500
          $region505: #{tpu_custom_call.1} parent=497 // loop_exit
            _
        $region498: #{tpu_custom_call.1} parent=279 // pred_fallthru
          _
        // Predicated region
        $region517: #{tpu_custom_call.1} parent=279 // pred_check
          _
        $region518: #{tpu_custom_call.1} parent=279 // pred_check_branch
          %1072 = sbr.rel (0) target = $region520
        $region519: #{tpu_custom_call.1} parent=279 // pred_region
          %1073 = vsyncadd %s658, 16
        $region520: #{tpu_custom_call.1} parent=279 // pred_fallthru
          _
      $region280: #{tpu_custom_call.1} parent=31 // pred_fallthru
        _
      // Predicated region
      $region521: #{tpu_custom_call.1} parent=31 // pred_check
        %p1074 = pneg %p208
      $region522: #{tpu_custom_call.1} parent=31 // pred_check_branch
        %1076 = sbr.rel (%p1074) target = $region524
      $region523: #{tpu_custom_call.1} parent=31 // pred_region
        %1077 = vst [vmem:[#allocation3] sm:$0x1] 0.0
        %vm1078 = vcmask 0
        %1079 = vst.msk [vmem:[#allocation4] sm:$0x1] %vm1078, 0.0
      $region524: #{tpu_custom_call.1} parent=31 // pred_fallthru
        _
      // Predicated region
      $region525: #{tpu_custom_call.1} parent=31 // pred_check
        %p1080 = pneg %p207
      $region526: #{tpu_custom_call.1} parent=31 // pred_check_branch
        %1082 = sbr.rel (%p1080) target = $region528
      $region527: #{tpu_custom_call.1} parent=31 // pred_region
        %s1083 = scalar_lea.sflag [#allocation5], %s204
        %s1084 = smul.u32 1, 1
        %s1085 = sshll.u32 %s1084, 4
        %1086 = dma.done %s1083, %s1085
        %s1087 = sshll.u32 %s1084, 4
        %1088 = dma.done %s1083, %s1087
        %s1089 = sshll.u32 %s1084, 4
        %1090 = dma.done %s1083, %s1089
        %s1091 = sshll.u32 %s1084, 4
        %1092 = dma.done %s1083, %s1091
        %s1093 = sshll.u32 %s1084, 4
        %1094 = dma.done %s1083, %s1093
        %s1095 = sshll.u32 %s1084, 4
        %1096 = dma.done %s1083, %s1095
        %s1097 = sshll.u32 %s1084, 4
        %1098 = dma.done %s1083, %s1097
        %s1099 = sshll.u32 %s1084, 4
        %1100 = dma.done %s1083, %s1099
        %s1101 = smul.u32 %s204, 8
        %s1102 = scalar_lea.vmem [#allocation2], %s1101
        %v1103 = vld [vmem:[%s1102] sm:$0xff]
        %s1104 = scalar_lea.vmem %s189, %s206
        %v1105 = vld [vmem:[%s1104] sm:$0xff]
        %v1106 = vld [vmem:[#allocation3] sm:$0x1]
        %1108 = vset.pattern.permute.xlu0 0
        %1109 = vperm.xlu0 %1108, %v1105
        %v1110 = vpop.permute.xlu0 %1109
        %v1112 = vmul.f32 %v1103, %v1110
        %v1113 = vrot.slane %v1112, 4
        %v1114 = vadd.f32 %v1112, %v1113
        %v1115 = vrot.slane %v1114, 2
        %v1116 = vadd.f32 %v1114, %v1115
        %v1117 = vrot.slane %v1116, 1
        %v1118 = vadd.f32 %v1116, %v1117
        %v1119 = vadd.f32 %v1106, %v1118
        %1120 = vst [vmem:[#allocation3] sm:$0x1] %v1119
        %v1121 = vld [vmem:[#allocation4] sm:$0x1]
        %vm1122 = vcmask 7168
        %v1123 = vsel %vm1122, %v1105, 0.0
        %v1124 = vrot.slane %v1123, 4
        %v1125 = vadd.f32 %v1123, %v1124
        %v1126 = vrot.slane %v1125, 2
        %v1127 = vadd.f32 %v1125, %v1126
        %v1128 = vrot.slane %v1127, 1
        %v1129 = vadd.f32 %v1127, %v1128
        %v1130 = vadd.f32 %v1121, %v1129
        %vm1131 = vcmask 0
        %1132 = vst.msk [vmem:[#allocation4] sm:$0x1] %vm1131, %v1130
      $region528: #{tpu_custom_call.1} parent=31 // pred_fallthru
        _
      %p1133 = scmp.eq.s32.totalorder %s33, 3
      // Predicated region
      $region529: #{tpu_custom_call.1} parent=31 // pred_check
        %p1134 = pneg %p1133
      $region530: #{tpu_custom_call.1} parent=31 // pred_check_branch
        %1136 = sbr.rel (%p1134) target = $region532
      $region531: #{tpu_custom_call.1} parent=31 // pred_region
        %v1137 = vld [vmem:[#allocation3] sm:$0x1]
        %v1138 = vld [vmem:[%s3] sm:$0x1]
        %v1139 = vmul.f32 %v1137, %v1138
        %vm1140 = vcmask 1040384
        %v1141 = vsel %vm1140, %v1139, 0.0
        %1142 = vadd.xlane.f32.xlu0 %v1141
        %v1143 = vpop.xlane.xlu0 %1142
        %v1144 = vld [vmem:[#allocation4] sm:$0x1]
        %v1145 = vmax.f32 %v1144, 1.0
        %v1146 = vrcp.pop %v1145
        %v1147 = vmul.f32 %v1143, %v1146
        %s1148 = sld [smem:[#allocation9]]
        %v1149 = vstv %s1148
        %v1150 = vadd.f32 %v1147, %v1149
        %vm1151 = vcmask 0
        %1152 = vst.msk [vmem:[%s192] sm:$0x1] %vm1151, %v1150
      $region532: #{tpu_custom_call.1} parent=31 // pred_fallthru
        _
      %p1153 = scmp.lt.s32.totalorder %s32, 1
      %s1154 = scalar_select %p1153, %s32, 1
      %s1155 = scalar_lea.vmem %s6, %s1154
      // Predicated region
      $region533: #{tpu_custom_call.1} parent=31 // pred_check
        %p1156 = pneg %p126
      $region534: #{tpu_custom_call.1} parent=31 // pred_check_branch
        %1158 = sbr.rel (%p1156) target = $region536
      $region535: #{tpu_custom_call.1} parent=31 // pred_region
        _
      $region536: #{tpu_custom_call.1} parent=31 // pred_fallthru
        _
    $region32: #{tpu_custom_call.1} parent=5 // pred_fallthru
      _
    %p1159 = scmp.le.s32.totalorder 2, %s23
    // Predicated region
    $region537: #{tpu_custom_call.1} parent=5 // pred_check
      %p1160 = pneg %p1159
    $region538: #{tpu_custom_call.1} parent=5 // pred_check_branch
      %1162 = sbr.rel (%p1160) target = $region540
    $region539: #{tpu_custom_call.1} parent=5 // pred_region
      %s1163 = ssub.s32 %s23, 2
      // Predicated region
      $region541: #{tpu_custom_call.1} parent=539 // pred_check
        %p1164 = pneg %p132
      $region542: #{tpu_custom_call.1} parent=539 // pred_check_branch
        %1166 = sbr.rel (%p1164) target = $region544
      $region543: #{tpu_custom_call.1} parent=539 // pred_region
        %p1167 = scmp.lt.s32.totalorder %s34, 1
        %s1168 = scalar_select %p1167, %s34, 1
        %s1169 = scalar_lea.vmem %s6, %s1168
      $region544: #{tpu_custom_call.1} parent=539 // pred_fallthru
        _
    $region540: #{tpu_custom_call.1} parent=5 // pred_fallthru
      _
  $region6: #{tpu_custom_call.1} parent=0 // loop_footer
    %s27 = sadd.s32 1, %s23
  $region7: #{tpu_custom_call.1} parent=0 // loop_footer_branch
    %22 = sbr.rel target = $region3
  $region8: #{tpu_custom_call.1} parent=0 // loop_exit
    _
  %1170 = vsyncmov [#allocation5]
  %s1171 = vpop.sfrf %1170
  %p1172 = scmp.eq.s32.totalorder %s1171, 0
  %p1173 = pneg %p1172
  %1175 = shalt.err (%p1173)
  %s1176 = scalar_lea.sflag [#allocation5], 1
  %1177 = vsyncmov %s1176
  %s1178 = vpop.sfrf %1177
  %p1179 = scmp.eq.s32.totalorder %s1178, 0
  %p1180 = pneg %p1179
  %1182 = shalt.err (%p1180)

</llo_original>
